<compile_context>
chip_gen: v7x
topology: tpu7x:2x2x1
jax: 0.10.0
libtpu: 0.0.40
codegen_flags: <defaults>
</compile_context>

<pallas_src>
import math

import jax
import jax.numpy as jnp
from jax import lax
from jax.experimental import pallas as pl
from jax.experimental.pallas import tpu as pltpu


_CONV_DIMS = [(1, 16), (16, 32), (32, 32), (32, 32)]   # 3x3, stride 2, pad 1
_LANE = 128


def _conv_out_shape(board_size):
    """Per-conv-layer output shapes (C, H, W)."""
    h = w = board_size
    shapes = []
    for (_, cout) in _CONV_DIMS:
        h = (h + 2 * 1 - 3) // 2 + 1
        w = (w + 2 * 1 - 3) // 2 + 1
        shapes.append((cout, h, w))
    return shapes


# ----------------------------------------------------------------------------
# Parameter init (PyTorch-shaped, PyTorch-default-like uniform init).
# ----------------------------------------------------------------------------
def init_params(key, board_size=16):
    def uinit(k, fan_in, shape_w, shape_b):
        kw, kb = jax.random.split(k)
        bound = 1.0 / math.sqrt(fan_in)
        w = jax.random.uniform(kw, shape_w, jnp.float32, -bound, bound)
        b = jax.random.uniform(kb, shape_b, jnp.float32, -bound, bound)
        return w, b

    keys = jax.random.split(key, len(_CONV_DIMS) + 4)
    params = {"conv": [], "fc": []}
    for i, (cin, cout) in enumerate(_CONV_DIMS):
        w, b = uinit(keys[i], cin * 9, (cout, cin, 3, 3), (cout,))
        params["conv"].append({"w": w, "b": b})

    out_dim = math.prod(_conv_out_shape(board_size)[-1])
    fc_dims = [(out_dim + 4, 128), (128, 64), (64, 16), (16, 1)]
    for j, (din, dout) in enumerate(fc_dims):
        w, b = uinit(keys[len(_CONV_DIMS) + j], din, (dout, din), (dout,))
        params["fc"].append({"w": w, "b": b})     # PyTorch Linear layout (out, in)
    return params


# ----------------------------------------------------------------------------
# One-time parameter preprocessing.
# ----------------------------------------------------------------------------
def _conv_layer_to_dense(w, b, in_shape, nhwc_input=False):
    """Fold Conv2d(k=3, s=2, p=1) into a dense (N_in, C_out*OH*OW) matrix acting
    on per-sample flattened vectors.  Input flattening order is NCHW by default
    or NHWC if `nhwc_input` (output flattening is always NCHW)."""
    c_in, h, w_sp = in_shape
    n_in = c_in * h * w_sp
    eye = jnp.eye(n_in, dtype=jnp.float32)
    if nhwc_input:
        basis = eye.reshape(n_in, h, w_sp, c_in).transpose(0, 3, 1, 2)
    else:
        basis = eye.reshape(n_in, c_in, h, w_sp)
    out = lax.conv_general_dilated(
        basis, w.astype(jnp.float32), window_strides=(2, 2),
        padding=((1, 1), (1, 1)),
        dimension_numbers=("NCHW", "OIHW", "NCHW"))
    c_out, oh, ow = out.shape[1], out.shape[2], out.shape[3]
    dense = out.reshape(n_in, c_out * oh * ow)
    b_flat = jnp.broadcast_to(
        b.astype(jnp.float32)[:, None, None], (c_out, oh, ow)).reshape(1, -1)
    return dense, b_flat, (c_out, oh, ow)


def _pad_cols(a, cols=_LANE):
    return jnp.pad(a, ((0, 0), (0, cols - a.shape[1])))


def _pad_rows(a, rows):
    return jnp.pad(a, ((0, rows - a.shape[0]), (0, 0)))


def _pack_rows(pieces):
    """Row-stack (name, f32 array with <=128 cols) into one (R, 128) bf16 buffer.

    Each piece is zero-padded to 128 lanes and to a multiple-of-8 sublanes so
    every piece starts at an 8-aligned row offset (clean static in-kernel
    slices).  Returns the packed buffer and {name: (row_start, row_count)} of
    plain python ints (row_count = unpadded/semantic rows)."""
    offsets, chunks, r = {}, [], 0
    for name, arr in pieces:
        nr = arr.shape[0]
        arr = _pad_cols(arr)
        arr = jnp.pad(arr, ((0, (-nr) % 8), (0, 0)))
        offsets[name] = (r, nr)
        chunks.append(arr)
        r += arr.shape[0]
    return jnp.concatenate(chunks, axis=0).astype(jnp.bfloat16), offsets


def prepare_params(params, board_size):
    shapes = _conv_out_shape(board_size)          # per-conv output (C, H, W)
    conv = params["conv"]

    # conv1 runs as a real (tiny) conv in the jitted wrapper — keep raw weights.
    conv1_w = conv[0]["w"].astype(jnp.float32)
    conv1_b = conv[0]["b"].astype(jnp.float32)

    # conv2 folded to dense, consuming NHWC-flattened conv1 activations; its
    # bias is appended as an extra row so the kernel gets ONE bf16 buffer.
    d2, b2c, _ = _conv_layer_to_dense(conv[1]["w"], conv[1]["b"], shapes[0],
                                      nhwc_input=True)
    n2_in, n2_out = d2.shape
    d2_aug = jnp.concatenate(
        [d2, b2c, jnp.zeros((7, n2_out), jnp.float32)], axis=0
    ).astype(jnp.bfloat16)                         # (n2_in + 8, n2_out)

    # conv3 / conv4 folded to dense on NCHW-flattened activations (tiny).
    d3, b3c, _ = _conv_layer_to_dense(conv[2]["w"], conv[2]["b"], shapes[1])
    d4, b4c, shape4 = _conv_layer_to_dense(conv[3]["w"], conv[3]["b"], shapes[2])
    out_dim = shape4[0] * shape4[1] * shape4[2]    # 32 for board_size = 16

    fc = params["fc"]
    # Split fc1 weight into conv-feature and action parts (kills the concat);
    # pad K dims to match the lane-padded activations (conv4 out -> 128, act -> 8).
    w1t = fc[0]["w"].T.astype(jnp.float32)         # (out_dim + 4, 128)
    w1a = _pad_rows(w1t[:out_dim], _LANE)
    w1b = _pad_rows(w1t[out_dim:], 8)
    b1 = fc[0]["b"].reshape(1, -1).astype(jnp.float32)

    w2 = fc[1]["w"].T.astype(jnp.float32)                      # (128, 64)
    b2f = fc[1]["b"].reshape(1, -1).astype(jnp.float32)
    w3 = _pad_rows(fc[2]["w"].T.astype(jnp.float32), _LANE)    # (64->128, 16)
    b3f = fc[2]["b"].reshape(1, -1).astype(jnp.float32)
    w4 = _pad_rows(fc[3]["w"].T.astype(jnp.float32), _LANE)    # (16->128, 1)
    b4f = fc[3]["b"].reshape(1, -1).astype(jnp.float32)

    small, offsets = _pack_rows([
        ("d3", d3), ("b3c", b3c),
        ("d4", d4), ("b4c", b4c),
        ("w1a", w1a), ("w1b", w1b), ("b1", b1),
        ("w2", w2), ("b2", b2f),
        ("w3", w3), ("b3", b3f),
        ("w4", w4), ("b4", b4f),
    ])

    weights = {"conv1_w": conv1_w, "conv1_b": conv1_b,
               "d2": d2_aug, "small": small}
    meta = {"n2_in": int(n2_in), "offsets": offsets}
    return weights, meta


# ----------------------------------------------------------------------------
# Fused Pallas kernel + jitted wrapper.
# ----------------------------------------------------------------------------
def make_critic_forward(meta):
    n2_in = meta["n2_in"]                 # python int (static)
    off = meta["offsets"]                 # python ints (static slice offsets)

    def sl(ref, name):
        start, rows = off[name]
        return ref[start:start + rows, :]

    def kernel(x1_ref, act_ref, d2_ref, small_ref, out_ref):
        f32, bf16 = jnp.float32, jnp.bfloat16

        def dense(h, w):
            return jnp.dot(h.astype(bf16), w, preferred_element_type=f32)

        def bias(name):
            return sl(small_ref, name).astype(f32)

        x1 = x1_ref[...]                  # (B, n2_in) f32, NHWC-flat conv1 act
        a = act_ref[...]                  # (B, 8) f32, action zero-padded 4->8

        # conv2 (folded dense; bias is the appended row of d2)
        h = dense(x1, d2_ref[0:n2_in, :]) + d2_ref[n2_in:n2_in + 1, :].astype(f32)
        h = jnp.maximum(h, 0.0)
        # conv3
        h = jnp.maximum(dense(h, sl(small_ref, "d3")) + bias("b3c"), 0.0)
        # conv4 (output zero-padded 32 -> 128 lanes)
        h = jnp.maximum(dense(h, sl(small_ref, "d4")) + bias("b4c"), 0.0)
        # fc1: conv-feature part + action part (the torch.cat as a split matmul)
        h = jnp.maximum(dense(h, sl(small_ref, "w1a"))
                        + dense(a, sl(small_ref, "w1b")) + bias("b1"), 0.0)
        # fc2 / fc3 (widths zero-padded to 128 lanes)
        h = jnp.maximum(dense(h, sl(small_ref, "w2")) + bias("b2"), 0.0)
        h = jnp.maximum(dense(h, sl(small_ref, "w3")) + bias("b3"), 0.0)
        # fc4 (no ReLU); lane-dense (B, 128) store, column 0 is the value.
        out_ref[...] = dense(h, sl(small_ref, "w4")) + bias("b4")

    @jax.jit
    def forward(weights, x, action):
        B = x.shape[0]
        # conv1 on the tiny raw board in the wrapper: its folded dense matrix
        # would be ~1 MiB vs 144 real weights (~30% of all kernel DMA bytes).
        y1 = lax.conv_general_dilated(
            x.astype(jnp.float32), weights["conv1_w"],
            window_strides=(2, 2), padding=((1, 1), (1, 1)),
            dimension_numbers=("NCHW", "OIHW", "NHWC"))
        y1 = jnp.maximum(y1 + weights["conv1_b"], 0.0)     # (B, OH, OW, 16)
        x1 = y1.reshape(B, -1)                             # NHWC flatten
        act = jnp.pad(action.astype(jnp.float32),
                      ((0, 0), (0, 8 - action.shape[1])))

        d2, small = weights["d2"], weights["small"]
        flops = 2 * B * (d2.shape[0] * d2.shape[1]
                         + small.shape[0] * small.shape[1])
        bytes_accessed = (d2.size * 2 + small.size * 2
                          + x1.size * 4 + act.size * 4 + B * _LANE * 4)

        out = pl.pallas_call(
            kernel,
            out_shape=jax.ShapeDtypeStruct((B, _LANE), jnp.float32),
            in_specs=[pl.BlockSpec(memory_space=pltpu.MemorySpace.VMEM)] * 4,
            out_specs=pl.BlockSpec(memory_space=pltpu.MemorySpace.VMEM),
            compiler_params=pltpu.CompilerParams(
                vmem_limit_bytes=16 * 1024 * 1024),
            cost_estimate=pl.CostEstimate(
                flops=flops, transcendentals=0, bytes_accessed=bytes_accessed),
        )(x1, act, d2, small)
        return out[:, :1]

    return forward


# ----------------------------------------------------------------------------
# Pure-JAX reference (mirrors the PyTorch module exactly) for a sanity check.
# ----------------------------------------------------------------------------
@jax.jit
def reference_forward(params, x, action):
    out = x
    for layer in params["conv"]:
        out = lax.conv_general_dilated(
            out, layer["w"], window_strides=(2, 2), padding=((1, 1), (1, 1)),
            dimension_numbers=("NCHW", "OIHW", "NCHW"))
        out = jnp.maximum(out + layer["b"][None, :, None, None], 0.0)
    B = x.shape[0]
    out = out.reshape(B, -1)
    out = jnp.concatenate([out, action], axis=1)
    n = len(params["fc"])
    for i, layer in enumerate(params["fc"]):
        out = out @ layer["w"].T + layer["b"]
        if i < n - 1:
            out = jnp.maximum(out, 0.0)
    return out


if __name__ == "__main__":
    key = jax.random.PRNGKey(0)
    kp, kx, ka = jax.random.split(key, 3)

    board_size = 16
    batch = 2
    params = init_params(kp, board_size=board_size)
    weights, meta = prepare_params(params, board_size)   # one-time preprocessing
    critic_forward = make_critic_forward(meta)

    x = jax.random.normal(kx, (batch, 1, board_size, board_size), dtype=jnp.float32)
    action = jax.random.normal(ka, (batch, 4), dtype=jnp.float32)

    out = jax.block_until_ready(critic_forward(weights, x, action))
    assert out.shape == (batch, 1), out.shape

    ref = jax.block_until_ready(reference_forward(params, x, action))
    assert jnp.allclose(out, ref, atol=5e-2, rtol=5e-2), (out, ref)

    print("KERNEL_OK")
</pallas_src>

<mosaic_0001>
module attributes {stable_mosaic.version = 11 : i64} {
  func.func @kernel(%arg0: memref<2x1024xf32, #tpu.memory_space<vmem>>, %arg1: memref<2x8xf32, #tpu.memory_space<vmem>>, %arg2: memref<1032x512xbf16, #tpu.memory_space<vmem>>, %arg3: memref<1208x128xbf16, #tpu.memory_space<vmem>>, %arg4: memref<2x128xf32, #tpu.memory_space<vmem>>) attributes {dimension_semantics = [], scalar_prefetch = 0 : i64, scratch_operands = 0 : i64, tpu.core_type = #tpu.core_type<tc>} {
    %c0 = arith.constant 0 : index
    %c0_0 = arith.constant 0 : index
    %0 = vector.load %arg0[%c0, %c0_0] : memref<2x1024xf32, #tpu.memory_space<vmem>>, vector<2x1024xf32>
    %c0_1 = arith.constant 0 : index
    %c0_2 = arith.constant 0 : index
    %1 = vector.load %arg1[%c0_1, %c0_2] : memref<2x8xf32, #tpu.memory_space<vmem>>, vector<2x8xf32>
    %c0_3 = arith.constant 0 : index
    %c0_4 = arith.constant 0 : index
    %2 = vector.load %arg2[%c0_3, %c0_4] : memref<1032x512xbf16, #tpu.memory_space<vmem>>, vector<1024x512xbf16>
    %3 = arith.truncf %0 : vector<2x1024xf32> to vector<2x1024xbf16>
    %cst = arith.constant dense<0.000000e+00> : vector<2x512xf32>
    %4 = tpu.matmul %3, %2, %cst {dimension_numbers = #tpu.dot_dimension_numbers<[1], [0], [0], [1], [0, 0, 1, 1], [], []>} : vector<2x1024xbf16>, vector<1024x512xbf16>, vector<2x512xf32> -> vector<2x512xf32>
    %c1024 = arith.constant 1024 : index
    %c0_5 = arith.constant 0 : index
    %5 = vector.load %arg2[%c1024, %c0_5] : memref<1032x512xbf16, #tpu.memory_space<vmem>>, vector<1x512xbf16>
    %6 = arith.extf %5 : vector<1x512xbf16> to vector<1x512xf32>
    %7 = vector.broadcast %6 : vector<1x512xf32> to vector<2x512xf32>
    %8 = arith.addf %4, %7 : vector<2x512xf32>
    %cst_6 = arith.constant 0.000000e+00 : f32
    %9 = vector.broadcast %cst_6 : f32 to vector<2x512xf32>
    %10 = arith.maximumf %8, %9 : vector<2x512xf32>
    %c0_7 = arith.constant 0 : index
    %c0_8 = arith.constant 0 : index
    %11 = vector.load %arg3[%c0_7, %c0_8] : memref<1208x128xbf16, #tpu.memory_space<vmem>>, vector<512x128xbf16>
    %12 = arith.truncf %10 : vector<2x512xf32> to vector<2x512xbf16>
    %cst_9 = arith.constant dense<0.000000e+00> : vector<2x128xf32>
    %13 = tpu.matmul %12, %11, %cst_9 {dimension_numbers = #tpu.dot_dimension_numbers<[1], [0], [0], [1], [0, 0, 1, 1], [], []>} : vector<2x512xbf16>, vector<512x128xbf16>, vector<2x128xf32> -> vector<2x128xf32>
    %c512 = arith.constant 512 : index
    %c0_10 = arith.constant 0 : index
    %14 = vector.load %arg3[%c512, %c0_10] : memref<1208x128xbf16, #tpu.memory_space<vmem>>, vector<1x128xbf16>
    %15 = arith.extf %14 : vector<1x128xbf16> to vector<1x128xf32>
    %16 = vector.broadcast %15 : vector<1x128xf32> to vector<2x128xf32>
    %17 = arith.addf %13, %16 : vector<2x128xf32>
    %cst_11 = arith.constant 0.000000e+00 : f32
    %18 = vector.broadcast %cst_11 : f32 to vector<2x128xf32>
    %19 = arith.maximumf %17, %18 : vector<2x128xf32>
    %c520 = arith.constant 520 : index
    %c0_12 = arith.constant 0 : index
    %20 = vector.load %arg3[%c520, %c0_12] : memref<1208x128xbf16, #tpu.memory_space<vmem>>, vector<128x128xbf16>
    %21 = arith.truncf %19 : vector<2x128xf32> to vector<2x128xbf16>
    %cst_13 = arith.constant dense<0.000000e+00> : vector<2x128xf32>
    %22 = tpu.matmul %21, %20, %cst_13 {dimension_numbers = #tpu.dot_dimension_numbers<[1], [0], [0], [1], [0, 0, 1, 1], [], []>} : vector<2x128xbf16>, vector<128x128xbf16>, vector<2x128xf32> -> vector<2x128xf32>
    %c648 = arith.constant 648 : index
    %c0_14 = arith.constant 0 : index
    %23 = vector.load %arg3[%c648, %c0_14] : memref<1208x128xbf16, #tpu.memory_space<vmem>>, vector<1x128xbf16>
    %24 = arith.extf %23 : vector<1x128xbf16> to vector<1x128xf32>
    %25 = vector.broadcast %24 : vector<1x128xf32> to vector<2x128xf32>
    %26 = arith.addf %22, %25 : vector<2x128xf32>
    %cst_15 = arith.constant 0.000000e+00 : f32
    %27 = vector.broadcast %cst_15 : f32 to vector<2x128xf32>
    %28 = arith.maximumf %26, %27 : vector<2x128xf32>
    %c656 = arith.constant 656 : index
    %c0_16 = arith.constant 0 : index
    %29 = vector.load %arg3[%c656, %c0_16] : memref<1208x128xbf16, #tpu.memory_space<vmem>>, vector<128x128xbf16>
    %30 = arith.truncf %28 : vector<2x128xf32> to vector<2x128xbf16>
    %cst_17 = arith.constant dense<0.000000e+00> : vector<2x128xf32>
    %31 = tpu.matmul %30, %29, %cst_17 {dimension_numbers = #tpu.dot_dimension_numbers<[1], [0], [0], [1], [0, 0, 1, 1], [], []>} : vector<2x128xbf16>, vector<128x128xbf16>, vector<2x128xf32> -> vector<2x128xf32>
    %c784 = arith.constant 784 : index
    %c0_18 = arith.constant 0 : index
    %32 = vector.load %arg3[%c784, %c0_18] : memref<1208x128xbf16, #tpu.memory_space<vmem>>, vector<8x128xbf16>
    %33 = arith.truncf %1 : vector<2x8xf32> to vector<2x8xbf16>
    %cst_19 = arith.constant dense<0.000000e+00> : vector<2x128xf32>
    %34 = tpu.matmul %33, %32, %cst_19 {dimension_numbers = #tpu.dot_dimension_numbers<[1], [0], [0], [1], [0, 0, 1, 1], [], []>} : vector<2x8xbf16>, vector<8x128xbf16>, vector<2x128xf32> -> vector<2x128xf32>
    %35 = arith.addf %31, %34 : vector<2x128xf32>
    %c792 = arith.constant 792 : index
    %c0_20 = arith.constant 0 : index
    %36 = vector.load %arg3[%c792, %c0_20] : memref<1208x128xbf16, #tpu.memory_space<vmem>>, vector<1x128xbf16>
    %37 = arith.extf %36 : vector<1x128xbf16> to vector<1x128xf32>
    %38 = vector.broadcast %37 : vector<1x128xf32> to vector<2x128xf32>
    %39 = arith.addf %35, %38 : vector<2x128xf32>
    %cst_21 = arith.constant 0.000000e+00 : f32
    %40 = vector.broadcast %cst_21 : f32 to vector<2x128xf32>
    %41 = arith.maximumf %39, %40 : vector<2x128xf32>
    %c800 = arith.constant 800 : index
    %c0_22 = arith.constant 0 : index
    %42 = vector.load %arg3[%c800, %c0_22] : memref<1208x128xbf16, #tpu.memory_space<vmem>>, vector<128x128xbf16>
    %43 = arith.truncf %41 : vector<2x128xf32> to vector<2x128xbf16>
    %cst_23 = arith.constant dense<0.000000e+00> : vector<2x128xf32>
    %44 = tpu.matmul %43, %42, %cst_23 {dimension_numbers = #tpu.dot_dimension_numbers<[1], [0], [0], [1], [0, 0, 1, 1], [], []>} : vector<2x128xbf16>, vector<128x128xbf16>, vector<2x128xf32> -> vector<2x128xf32>
    %c928 = arith.constant 928 : index
    %c0_24 = arith.constant 0 : index
    %45 = vector.load %arg3[%c928, %c0_24] : memref<1208x128xbf16, #tpu.memory_space<vmem>>, vector<1x128xbf16>
    %46 = arith.extf %45 : vector<1x128xbf16> to vector<1x128xf32>
    %47 = vector.broadcast %46 : vector<1x128xf32> to vector<2x128xf32>
    %48 = arith.addf %44, %47 : vector<2x128xf32>
    %cst_25 = arith.constant 0.000000e+00 : f32
    %49 = vector.broadcast %cst_25 : f32 to vector<2x128xf32>
    %50 = arith.maximumf %48, %49 : vector<2x128xf32>
    %c936 = arith.constant 936 : index
    %c0_26 = arith.constant 0 : index
    %51 = vector.load %arg3[%c936, %c0_26] : memref<1208x128xbf16, #tpu.memory_space<vmem>>, vector<128x128xbf16>
    %52 = arith.truncf %50 : vector<2x128xf32> to vector<2x128xbf16>
    %cst_27 = arith.constant dense<0.000000e+00> : vector<2x128xf32>
    %53 = tpu.matmul %52, %51, %cst_27 {dimension_numbers = #tpu.dot_dimension_numbers<[1], [0], [0], [1], [0, 0, 1, 1], [], []>} : vector<2x128xbf16>, vector<128x128xbf16>, vector<2x128xf32> -> vector<2x128xf32>
    %c1064 = arith.constant 1064 : index
    %c0_28 = arith.constant 0 : index
    %54 = vector.load %arg3[%c1064, %c0_28] : memref<1208x128xbf16, #tpu.memory_space<vmem>>, vector<1x128xbf16>
    %55 = arith.extf %54 : vector<1x128xbf16> to vector<1x128xf32>
    %56 = vector.broadcast %55 : vector<1x128xf32> to vector<2x128xf32>
    %57 = arith.addf %53, %56 : vector<2x128xf32>
    %cst_29 = arith.constant 0.000000e+00 : f32
    %58 = vector.broadcast %cst_29 : f32 to vector<2x128xf32>
    %59 = arith.maximumf %57, %58 : vector<2x128xf32>
    %c1072 = arith.constant 1072 : index
    %c0_30 = arith.constant 0 : index
    %60 = vector.load %arg3[%c1072, %c0_30] : memref<1208x128xbf16, #tpu.memory_space<vmem>>, vector<128x128xbf16>
    %61 = arith.truncf %59 : vector<2x128xf32> to vector<2x128xbf16>
    %cst_31 = arith.constant dense<0.000000e+00> : vector<2x128xf32>
    %62 = tpu.matmul %61, %60, %cst_31 {dimension_numbers = #tpu.dot_dimension_numbers<[1], [0], [0], [1], [0, 0, 1, 1], [], []>} : vector<2x128xbf16>, vector<128x128xbf16>, vector<2x128xf32> -> vector<2x128xf32>
    %c1200 = arith.constant 1200 : index
    %c0_32 = arith.constant 0 : index
    %63 = vector.load %arg3[%c1200, %c0_32] : memref<1208x128xbf16, #tpu.memory_space<vmem>>, vector<1x128xbf16>
    %64 = arith.extf %63 : vector<1x128xbf16> to vector<1x128xf32>
    %65 = vector.broadcast %64 : vector<1x128xf32> to vector<2x128xf32>
    %66 = arith.addf %62, %65 : vector<2x128xf32>
    %c0_33 = arith.constant 0 : index
    %c0_34 = arith.constant 0 : index
    %67 = vector.load %arg4[%c0_33, %c0_34] : memref<2x128xf32, #tpu.memory_space<vmem>>, vector<2x128xf32>
    tpu.vector_store %arg4[%c0_33, %c0_34], %66 {strides = array<i32>} : memref<2x128xf32, #tpu.memory_space<vmem>>, vector<2x128xf32>,
    return
  }
}

</mosaic_0001>

<llo_original>
// kernel: forward.1
$region0: #{forward.1}
  #allocation0 [shape = 'u32[]', space=smem, size = 0x4, offset = 0x4, fixed_abs, tag = 'smem constant byte address 0x4 - core index']
  #allocation1 [shape = 'u32[144,128]{1,0:T(1,128)}', space=vmem, size = 0x12000, scoped, tag = 'internal scratch']
  %s0 = inlined_call_operand.vmem [shape: f32[2,1024], index: 0, kind: input, shape index: {}]
  %s1 = inlined_call_operand.vmem [shape: f32[2,8], index: 1, kind: input, shape index: {}]
  %s2 = inlined_call_operand.hbm [shape: bf16[1032,512], index: 2, kind: input, shape index: {}]
  %s3 = inlined_call_operand.hbm [shape: bf16[1208,128], index: 3, kind: input, shape index: {}]
  %s4 = inlined_call_operand.vmem [shape: f32[2,128], index: 4, kind: output, shape index: {}]
  %s5 = sld [smem:[#allocation0]]
  $region34: #{forward.1} parent=0
    _
  %s7 = ssub.s32 1, %s5
  %s8 = scalar_select 0, %s7, %s5
  $region1: #{forward.1} parent=0
    #allocation2 [shape = 'u8[1056768]{0}', space=vmem, size = 0x102000, scoped, tag = 'input window, operand 2, single buffered']
    #allocation3 [shape = 's32[1]{0}', space=sflag, size = 0x4, scoped, tag = 'scoped memory for forward.1']
    #allocation4 [shape = 'u8[309248]{0}', space=vmem, size = 0x4b800, scoped, tag = 'input window, operand 3, single buffered']
    #allocation5 [shape = 's32[1]{0}', space=sflag, size = 0x4, scoped, tag = 'scoped memory for forward.1']
    %9 = vsyncpa [#allocation3], 0
    %10 = vsyncpa [#allocation5], 0
    // Predicated region
    $region2: #{forward.1} parent=1 // pred_check
      _
    $region3: #{forward.1} parent=1 // pred_check_branch
      %12 = sbr.rel (0) target = $region5
    $region4: #{forward.1} parent=1 // pred_region
      _
    $region5: #{forward.1} parent=1 // pred_fallthru
      _
    // Predicated region
    $region6: #{forward.1} parent=1 // pred_check
      _
    $region7: #{forward.1} parent=1 // pred_check_branch
      %14 = sbr.rel (0) target = $region9
    $region8: #{forward.1} parent=1 // pred_region
      _
    $region9: #{forward.1} parent=1 // pred_fallthru
      _
    // Predicated region
    $region10: #{forward.1} parent=1 // pred_check
      _
    $region11: #{forward.1} parent=1 // pred_check_branch
      %16 = sbr.rel (0) target = $region13
    $region12: #{forward.1} parent=1 // pred_region
      %s18 = ssub.s32 33024, 33024
      %19 = vsyncadd [#allocation3], %s18
      %s20 = sshll.u32 [#allocation2], 4
      %s21 = int_to_ptr.vmem [resolvable:$true] %s20
      %26 = dma.hbm_to_vmem [thread:$0]  %s2, 33024, %s21, [#allocation3], 256, 256, 16
    $region13: #{forward.1} parent=1 // pred_fallthru
      _
    // Predicated region
    $region14: #{forward.1} parent=1 // pred_check
      _
    $region15: #{forward.1} parent=1 // pred_check_branch
      %28 = sbr.rel (0) target = $region17
    $region16: #{forward.1} parent=1 // pred_region
      %s30 = ssub.s32 9664, 9664
      %31 = vsyncadd [#allocation5], %s30
      %s32 = sshll.u32 [#allocation4], 4
      %s33 = int_to_ptr.vmem [resolvable:$true] %s32
      %38 = dma.hbm_to_vmem [thread:$0]  %s3, 9664, %s33, [#allocation5], 64, 64, 4
    $region17: #{forward.1} parent=1 // pred_fallthru
      _
    // Predicated region
    $region18: #{forward.1} parent=1 // pred_check
      _
    $region19: #{forward.1} parent=1 // pred_check_branch
      %40 = sbr.rel (0) target = $region21
    $region20: #{forward.1} parent=1 // pred_region
      %41 = dma.done [#allocation3], 33024
    $region21: #{forward.1} parent=1 // pred_fallthru
      _
    // Predicated region
    $region22: #{forward.1} parent=1 // pred_check
      _
    $region23: #{forward.1} parent=1 // pred_check_branch
      %43 = sbr.rel (0) target = $region25
    $region24: #{forward.1} parent=1 // pred_region
      %44 = dma.done [#allocation5], 9664
    $region25: #{forward.1} parent=1 // pred_fallthru
      _
    %v46 = vld [vmem:[%s0] sm:$0xff]
    %v47 = vld [vmem:[%s0 + $0x8] sm:$0xff]
    %v48 = vld [vmem:[%s1] sm:$0x3]
    %v49 = vld [vmem:[#allocation2] sm:$0xff]
    %v50 = vld [vmem:[#allocation2 + $0x8] sm:$0xff]
    %v51 = vld [vmem:[#allocation2 + $0x10] sm:$0xff]
    %v52 = vld [vmem:[#allocation2 + $0x18] sm:$0xff]
    %v53 = vld [vmem:[#allocation2 + $0x20] sm:$0xff]
    %v54 = vld [vmem:[#allocation2 + $0x28] sm:$0xff]
    %v55 = vld [vmem:[#allocation2 + $0x30] sm:$0xff]
    %v56 = vld [vmem:[#allocation2 + $0x38] sm:$0xff]
    %v57 = vld [vmem:[#allocation2 + $0x40] sm:$0xff]
    %v58 = vld [vmem:[#allocation2 + $0x48] sm:$0xff]
    %v59 = vld [vmem:[#allocation2 + $0x50] sm:$0xff]
    %v60 = vld [vmem:[#allocation2 + $0x58] sm:$0xff]
    %v61 = vld [vmem:[#allocation2 + $0x60] sm:$0xff]
    %v62 = vld [vmem:[#allocation2 + $0x68] sm:$0xff]
    %v63 = vld [vmem:[#allocation2 + $0x70] sm:$0xff]
    %v64 = vld [vmem:[#allocation2 + $0x78] sm:$0xff]
    %v65 = vld [vmem:[#allocation2 + $0x80] sm:$0xff]
    %v66 = vld [vmem:[#allocation2 + $0x88] sm:$0xff]
    %v67 = vld [vmem:[#allocation2 + $0x90] sm:$0xff]
    %v68 = vld [vmem:[#allocation2 + $0x98] sm:$0xff]
    %v69 = vld [vmem:[#allocation2 + $0xa0] sm:$0xff]
    %v70 = vld [vmem:[#allocation2 + $0xa8] sm:$0xff]
    %v71 = vld [vmem:[#allocation2 + $0xb0] sm:$0xff]
    %v72 = vld [vmem:[#allocation2 + $0xb8] sm:$0xff]
    %v73 = vld [vmem:[#allocation2 + $0xc0] sm:$0xff]
    %v74 = vld [vmem:[#allocation2 + $0xc8] sm:$0xff]
    %v75 = vld [vmem:[#allocation2 + $0xd0] sm:$0xff]
    %v76 = vld [vmem:[#allocation2 + $0xd8] sm:$0xff]
    %v77 = vld [vmem:[#allocation2 + $0xe0] sm:$0xff]
    %v78 = vld [vmem:[#allocation2 + $0xe8] sm:$0xff]
    %v79 = vld [vmem:[#allocation2 + $0xf0] sm:$0xff]
    %v80 = vld [vmem:[#allocation2 + $0xf8] sm:$0xff]
    %v81 = vld [vmem:[#allocation2 + $0x100] sm:$0xff]
    %v82 = vld [vmem:[#allocation2 + $0x108] sm:$0xff]
    %v83 = vld [vmem:[#allocation2 + $0x110] sm:$0xff]
    %v84 = vld [vmem:[#allocation2 + $0x118] sm:$0xff]
    %v85 = vld [vmem:[#allocation2 + $0x120] sm:$0xff]
    %v86 = vld [vmem:[#allocation2 + $0x128] sm:$0xff]
    %v87 = vld [vmem:[#allocation2 + $0x130] sm:$0xff]
    %v88 = vld [vmem:[#allocation2 + $0x138] sm:$0xff]
    %v89 = vld [vmem:[#allocation2 + $0x140] sm:$0xff]
    %v90 = vld [vmem:[#allocation2 + $0x148] sm:$0xff]
    %v91 = vld [vmem:[#allocation2 + $0x150] sm:$0xff]
    %v92 = vld [vmem:[#allocation2 + $0x158] sm:$0xff]
    %v93 = vld [vmem:[#allocation2 + $0x160] sm:$0xff]
    %v94 = vld [vmem:[#allocation2 + $0x168] sm:$0xff]
    %v95 = vld [vmem:[#allocation2 + $0x170] sm:$0xff]
    %v96 = vld [vmem:[#allocation2 + $0x178] sm:$0xff]
    %v97 = vld [vmem:[#allocation2 + $0x180] sm:$0xff]
    %v98 = vld [vmem:[#allocation2 + $0x188] sm:$0xff]
    %v99 = vld [vmem:[#allocation2 + $0x190] sm:$0xff]
    %v100 = vld [vmem:[#allocation2 + $0x198] sm:$0xff]
    %v101 = vld [vmem:[#allocation2 + $0x1a0] sm:$0xff]
    %v102 = vld [vmem:[#allocation2 + $0x1a8] sm:$0xff]
    %v103 = vld [vmem:[#allocation2 + $0x1b0] sm:$0xff]
    %v104 = vld [vmem:[#allocation2 + $0x1b8] sm:$0xff]
    %v105 = vld [vmem:[#allocation2 + $0x1c0] sm:$0xff]
    %v106 = vld [vmem:[#allocation2 + $0x1c8] sm:$0xff]
    %v107 = vld [vmem:[#allocation2 + $0x1d0] sm:$0xff]
    %v108 = vld [vmem:[#allocation2 + $0x1d8] sm:$0xff]
    %v109 = vld [vmem:[#allocation2 + $0x1e0] sm:$0xff]
    %v110 = vld [vmem:[#allocation2 + $0x1e8] sm:$0xff]
    %v111 = vld [vmem:[#allocation2 + $0x1f0] sm:$0xff]
    %v112 = vld [vmem:[#allocation2 + $0x1f8] sm:$0xff]
    %v113 = vld [vmem:[#allocation2 + $0x200] sm:$0xff]
    %v114 = vld [vmem:[#allocation2 + $0x208] sm:$0xff]
    %v115 = vld [vmem:[#allocation2 + $0x210] sm:$0xff]
    %v116 = vld [vmem:[#allocation2 + $0x218] sm:$0xff]
    %v117 = vld [vmem:[#allocation2 + $0x220] sm:$0xff]
    %v118 = vld [vmem:[#allocation2 + $0x228] sm:$0xff]
    %v119 = vld [vmem:[#allocation2 + $0x230] sm:$0xff]
    %v120 = vld [vmem:[#allocation2 + $0x238] sm:$0xff]
    %v121 = vld [vmem:[#allocation2 + $0x240] sm:$0xff]
    %v122 = vld [vmem:[#allocation2 + $0x248] sm:$0xff]
    %v123 = vld [vmem:[#allocation2 + $0x250] sm:$0xff]
    %v124 = vld [vmem:[#allocation2 + $0x258] sm:$0xff]
    %v125 = vld [vmem:[#allocation2 + $0x260] sm:$0xff]
    %v126 = vld [vmem:[#allocation2 + $0x268] sm:$0xff]
    %v127 = vld [vmem:[#allocation2 + $0x270] sm:$0xff]
    %v128 = vld [vmem:[#allocation2 + $0x278] sm:$0xff]
    %v129 = vld [vmem:[#allocation2 + $0x280] sm:$0xff]
    %v130 = vld [vmem:[#allocation2 + $0x288] sm:$0xff]
    %v131 = vld [vmem:[#allocation2 + $0x290] sm:$0xff]
    %v132 = vld [vmem:[#allocation2 + $0x298] sm:$0xff]
    %v133 = vld [vmem:[#allocation2 + $0x2a0] sm:$0xff]
    %v134 = vld [vmem:[#allocation2 + $0x2a8] sm:$0xff]
    %v135 = vld [vmem:[#allocation2 + $0x2b0] sm:$0xff]
    %v136 = vld [vmem:[#allocation2 + $0x2b8] sm:$0xff]
    %v137 = vld [vmem:[#allocation2 + $0x2c0] sm:$0xff]
    %v138 = vld [vmem:[#allocation2 + $0x2c8] sm:$0xff]
    %v139 = vld [vmem:[#allocation2 + $0x2d0] sm:$0xff]
    %v140 = vld [vmem:[#allocation2 + $0x2d8] sm:$0xff]
    %v141 = vld [vmem:[#allocation2 + $0x2e0] sm:$0xff]
    %v142 = vld [vmem:[#allocation2 + $0x2e8] sm:$0xff]
    %v143 = vld [vmem:[#allocation2 + $0x2f0] sm:$0xff]
    %v144 = vld [vmem:[#allocation2 + $0x2f8] sm:$0xff]
    %v145 = vld [vmem:[#allocation2 + $0x300] sm:$0xff]
    %v146 = vld [vmem:[#allocation2 + $0x308] sm:$0xff]
    %v147 = vld [vmem:[#allocation2 + $0x310] sm:$0xff]
    %v148 = vld [vmem:[#allocation2 + $0x318] sm:$0xff]
    %v149 = vld [vmem:[#allocation2 + $0x320] sm:$0xff]
    %v150 = vld [vmem:[#allocation2 + $0x328] sm:$0xff]
    %v151 = vld [vmem:[#allocation2 + $0x330] sm:$0xff]
    %v152 = vld [vmem:[#allocation2 + $0x338] sm:$0xff]
    %v153 = vld [vmem:[#allocation2 + $0x340] sm:$0xff]
    %v154 = vld [vmem:[#allocation2 + $0x348] sm:$0xff]
    %v155 = vld [vmem:[#allocation2 + $0x350] sm:$0xff]
    %v156 = vld [vmem:[#allocation2 + $0x358] sm:$0xff]
    %v157 = vld [vmem:[#allocation2 + $0x360] sm:$0xff]
    %v158 = vld [vmem:[#allocation2 + $0x368] sm:$0xff]
    %v159 = vld [vmem:[#allocation2 + $0x370] sm:$0xff]
    %v160 = vld [vmem:[#allocation2 + $0x378] sm:$0xff]
    %v161 = vld [vmem:[#allocation2 + $0x380] sm:$0xff]
    %v162 = vld [vmem:[#allocation2 + $0x388] sm:$0xff]
    %v163 = vld [vmem:[#allocation2 + $0x390] sm:$0xff]
    %v164 = vld [vmem:[#allocation2 + $0x398] sm:$0xff]
    %v165 = vld [vmem:[#allocation2 + $0x3a0] sm:$0xff]
    %v166 = vld [vmem:[#allocation2 + $0x3a8] sm:$0xff]
    %v167 = vld [vmem:[#allocation2 + $0x3b0] sm:$0xff]
    %v168 = vld [vmem:[#allocation2 + $0x3b8] sm:$0xff]
    %v169 = vld [vmem:[#allocation2 + $0x3c0] sm:$0xff]
    %v170 = vld [vmem:[#allocation2 + $0x3c8] sm:$0xff]
    %v171 = vld [vmem:[#allocation2 + $0x3d0] sm:$0xff]
    %v172 = vld [vmem:[#allocation2 + $0x3d8] sm:$0xff]
    %v173 = vld [vmem:[#allocation2 + $0x3e0] sm:$0xff]
    %v174 = vld [vmem:[#allocation2 + $0x3e8] sm:$0xff]
    %v175 = vld [vmem:[#allocation2 + $0x3f0] sm:$0xff]
    %v176 = vld [vmem:[#allocation2 + $0x3f8] sm:$0xff]
    %v177 = vld [vmem:[#allocation2 + $0x400] sm:$0xff]
    %v178 = vld [vmem:[#allocation2 + $0x408] sm:$0xff]
    %v179 = vld [vmem:[#allocation2 + $0x410] sm:$0xff]
    %v180 = vld [vmem:[#allocation2 + $0x418] sm:$0xff]
    %v181 = vld [vmem:[#allocation2 + $0x420] sm:$0xff]
    %v182 = vld [vmem:[#allocation2 + $0x428] sm:$0xff]
    %v183 = vld [vmem:[#allocation2 + $0x430] sm:$0xff]
    %v184 = vld [vmem:[#allocation2 + $0x438] sm:$0xff]
    %v185 = vld [vmem:[#allocation2 + $0x440] sm:$0xff]
    %v186 = vld [vmem:[#allocation2 + $0x448] sm:$0xff]
    %v187 = vld [vmem:[#allocation2 + $0x450] sm:$0xff]
    %v188 = vld [vmem:[#allocation2 + $0x458] sm:$0xff]
    %v189 = vld [vmem:[#allocation2 + $0x460] sm:$0xff]
    %v190 = vld [vmem:[#allocation2 + $0x468] sm:$0xff]
    %v191 = vld [vmem:[#allocation2 + $0x470] sm:$0xff]
    %v192 = vld [vmem:[#allocation2 + $0x478] sm:$0xff]
    %v193 = vld [vmem:[#allocation2 + $0x480] sm:$0xff]
    %v194 = vld [vmem:[#allocation2 + $0x488] sm:$0xff]
    %v195 = vld [vmem:[#allocation2 + $0x490] sm:$0xff]
    %v196 = vld [vmem:[#allocation2 + $0x498] sm:$0xff]
    %v197 = vld [vmem:[#allocation2 + $0x4a0] sm:$0xff]
    %v198 = vld [vmem:[#allocation2 + $0x4a8] sm:$0xff]
    %v199 = vld [vmem:[#allocation2 + $0x4b0] sm:$0xff]
    %v200 = vld [vmem:[#allocation2 + $0x4b8] sm:$0xff]
    %v201 = vld [vmem:[#allocation2 + $0x4c0] sm:$0xff]
    %v202 = vld [vmem:[#allocation2 + $0x4c8] sm:$0xff]
    %v203 = vld [vmem:[#allocation2 + $0x4d0] sm:$0xff]
    %v204 = vld [vmem:[#allocation2 + $0x4d8] sm:$0xff]
    %v205 = vld [vmem:[#allocation2 + $0x4e0] sm:$0xff]
    %v206 = vld [vmem:[#allocation2 + $0x4e8] sm:$0xff]
    %v207 = vld [vmem:[#allocation2 + $0x4f0] sm:$0xff]
    %v208 = vld [vmem:[#allocation2 + $0x4f8] sm:$0xff]
    %v209 = vld [vmem:[#allocation2 + $0x500] sm:$0xff]
    %v210 = vld [vmem:[#allocation2 + $0x508] sm:$0xff]
    %v211 = vld [vmem:[#allocation2 + $0x510] sm:$0xff]
    %v212 = vld [vmem:[#allocation2 + $0x518] sm:$0xff]
    %v213 = vld [vmem:[#allocation2 + $0x520] sm:$0xff]
    %v214 = vld [vmem:[#allocation2 + $0x528] sm:$0xff]
    %v215 = vld [vmem:[#allocation2 + $0x530] sm:$0xff]
    %v216 = vld [vmem:[#allocation2 + $0x538] sm:$0xff]
    %v217 = vld [vmem:[#allocation2 + $0x540] sm:$0xff]
    %v218 = vld [vmem:[#allocation2 + $0x548] sm:$0xff]
    %v219 = vld [vmem:[#allocation2 + $0x550] sm:$0xff]
    %v220 = vld [vmem:[#allocation2 + $0x558] sm:$0xff]
    %v221 = vld [vmem:[#allocation2 + $0x560] sm:$0xff]
    %v222 = vld [vmem:[#allocation2 + $0x568] sm:$0xff]
    %v223 = vld [vmem:[#allocation2 + $0x570] sm:$0xff]
    %v224 = vld [vmem:[#allocation2 + $0x578] sm:$0xff]
    %v225 = vld [vmem:[#allocation2 + $0x580] sm:$0xff]
    %v226 = vld [vmem:[#allocation2 + $0x588] sm:$0xff]
    %v227 = vld [vmem:[#allocation2 + $0x590] sm:$0xff]
    %v228 = vld [vmem:[#allocation2 + $0x598] sm:$0xff]
    %v229 = vld [vmem:[#allocation2 + $0x5a0] sm:$0xff]
    %v230 = vld [vmem:[#allocation2 + $0x5a8] sm:$0xff]
    %v231 = vld [vmem:[#allocation2 + $0x5b0] sm:$0xff]
    %v232 = vld [vmem:[#allocation2 + $0x5b8] sm:$0xff]
    %v233 = vld [vmem:[#allocation2 + $0x5c0] sm:$0xff]
    %v234 = vld [vmem:[#allocation2 + $0x5c8] sm:$0xff]
    %v235 = vld [vmem:[#allocation2 + $0x5d0] sm:$0xff]
    %v236 = vld [vmem:[#allocation2 + $0x5d8] sm:$0xff]
    %v237 = vld [vmem:[#allocation2 + $0x5e0] sm:$0xff]
    %v238 = vld [vmem:[#allocation2 + $0x5e8] sm:$0xff]
    %v239 = vld [vmem:[#allocation2 + $0x5f0] sm:$0xff]
    %v240 = vld [vmem:[#allocation2 + $0x5f8] sm:$0xff]
    %v241 = vld [vmem:[#allocation2 + $0x600] sm:$0xff]
    %v242 = vld [vmem:[#allocation2 + $0x608] sm:$0xff]
    %v243 = vld [vmem:[#allocation2 + $0x610] sm:$0xff]
    %v244 = vld [vmem:[#allocation2 + $0x618] sm:$0xff]
    %v245 = vld [vmem:[#allocation2 + $0x620] sm:$0xff]
    %v246 = vld [vmem:[#allocation2 + $0x628] sm:$0xff]
    %v247 = vld [vmem:[#allocation2 + $0x630] sm:$0xff]
    %v248 = vld [vmem:[#allocation2 + $0x638] sm:$0xff]
    %v249 = vld [vmem:[#allocation2 + $0x640] sm:$0xff]
    %v250 = vld [vmem:[#allocation2 + $0x648] sm:$0xff]
    %v251 = vld [vmem:[#allocation2 + $0x650] sm:$0xff]
    %v252 = vld [vmem:[#allocation2 + $0x658] sm:$0xff]
    %v253 = vld [vmem:[#allocation2 + $0x660] sm:$0xff]
    %v254 = vld [vmem:[#allocation2 + $0x668] sm:$0xff]
    %v255 = vld [vmem:[#allocation2 + $0x670] sm:$0xff]
    %v256 = vld [vmem:[#allocation2 + $0x678] sm:$0xff]
    %v257 = vld [vmem:[#allocation2 + $0x680] sm:$0xff]
    %v258 = vld [vmem:[#allocation2 + $0x688] sm:$0xff]
    %v259 = vld [vmem:[#allocation2 + $0x690] sm:$0xff]
    %v260 = vld [vmem:[#allocation2 + $0x698] sm:$0xff]
    %v261 = vld [vmem:[#allocation2 + $0x6a0] sm:$0xff]
    %v262 = vld [vmem:[#allocation2 + $0x6a8] sm:$0xff]
    %v263 = vld [vmem:[#allocation2 + $0x6b0] sm:$0xff]
    %v264 = vld [vmem:[#allocation2 + $0x6b8] sm:$0xff]
    %v265 = vld [vmem:[#allocation2 + $0x6c0] sm:$0xff]
    %v266 = vld [vmem:[#allocation2 + $0x6c8] sm:$0xff]
    %v267 = vld [vmem:[#allocation2 + $0x6d0] sm:$0xff]
    %v268 = vld [vmem:[#allocation2 + $0x6d8] sm:$0xff]
    %v269 = vld [vmem:[#allocation2 + $0x6e0] sm:$0xff]
    %v270 = vld [vmem:[#allocation2 + $0x6e8] sm:$0xff]
    %v271 = vld [vmem:[#allocation2 + $0x6f0] sm:$0xff]
    %v272 = vld [vmem:[#allocation2 + $0x6f8] sm:$0xff]
    %v273 = vld [vmem:[#allocation2 + $0x700] sm:$0xff]
    %v274 = vld [vmem:[#allocation2 + $0x708] sm:$0xff]
    %v275 = vld [vmem:[#allocation2 + $0x710] sm:$0xff]
    %v276 = vld [vmem:[#allocation2 + $0x718] sm:$0xff]
    %v277 = vld [vmem:[#allocation2 + $0x720] sm:$0xff]
    %v278 = vld [vmem:[#allocation2 + $0x728] sm:$0xff]
    %v279 = vld [vmem:[#allocation2 + $0x730] sm:$0xff]
    %v280 = vld [vmem:[#allocation2 + $0x738] sm:$0xff]
    %v281 = vld [vmem:[#allocation2 + $0x740] sm:$0xff]
    %v282 = vld [vmem:[#allocation2 + $0x748] sm:$0xff]
    %v283 = vld [vmem:[#allocation2 + $0x750] sm:$0xff]
    %v284 = vld [vmem:[#allocation2 + $0x758] sm:$0xff]
    %v285 = vld [vmem:[#allocation2 + $0x760] sm:$0xff]
    %v286 = vld [vmem:[#allocation2 + $0x768] sm:$0xff]
    %v287 = vld [vmem:[#allocation2 + $0x770] sm:$0xff]
    %v288 = vld [vmem:[#allocation2 + $0x778] sm:$0xff]
    %v289 = vld [vmem:[#allocation2 + $0x780] sm:$0xff]
    %v290 = vld [vmem:[#allocation2 + $0x788] sm:$0xff]
    %v291 = vld [vmem:[#allocation2 + $0x790] sm:$0xff]
    %v292 = vld [vmem:[#allocation2 + $0x798] sm:$0xff]
    %v293 = vld [vmem:[#allocation2 + $0x7a0] sm:$0xff]
    %v294 = vld [vmem:[#allocation2 + $0x7a8] sm:$0xff]
    %v295 = vld [vmem:[#allocation2 + $0x7b0] sm:$0xff]
    %v296 = vld [vmem:[#allocation2 + $0x7b8] sm:$0xff]
    %v297 = vld [vmem:[#allocation2 + $0x7c0] sm:$0xff]
    %v298 = vld [vmem:[#allocation2 + $0x7c8] sm:$0xff]
    %v299 = vld [vmem:[#allocation2 + $0x7d0] sm:$0xff]
    %v300 = vld [vmem:[#allocation2 + $0x7d8] sm:$0xff]
    %v301 = vld [vmem:[#allocation2 + $0x7e0] sm:$0xff]
    %v302 = vld [vmem:[#allocation2 + $0x7e8] sm:$0xff]
    %v303 = vld [vmem:[#allocation2 + $0x7f0] sm:$0xff]
    %v304 = vld [vmem:[#allocation2 + $0x7f8] sm:$0xff]
    %v307 = vcombine.high %v46, %v46
    %v309 = vunpack.c.l.s4 1983009808
    %v310 = vunpack.c.0.s8 %v309
    %v311 = vlaneseq
    %v312 = vshrl.u32 %v311, 7
    %v313 = vsub.s32 %v310, %v312
    %v314 = vrot.slane %v46, %v313
    %v316 = vunpack.c.l.s4 1983009808
    %v317 = vunpack.c.0.s8 %v316
    %v318 = vlaneseq
    %v319 = vshrl.u32 %v318, 7
    %v320 = vsub.s32 %v317, %v319
    %v321 = vrot.slane %v307, %v320
    %v322 = vcombine.high %v314, %v314
    %v323 = vcombine.high %v321, %v321
    %v324 = vcombine.high %v47, %v47
    %v326 = vunpack.c.l.s4 1983009808
    %v327 = vunpack.c.0.s8 %v326
    %v328 = vlaneseq
    %v329 = vshrl.u32 %v328, 7
    %v330 = vsub.s32 %v327, %v329
    %v331 = vrot.slane %v47, %v330
    %v333 = vunpack.c.l.s4 1983009808
    %v334 = vunpack.c.0.s8 %v333
    %v335 = vlaneseq
    %v336 = vshrl.u32 %v335, 7
    %v337 = vsub.s32 %v334, %v336
    %v338 = vrot.slane %v324, %v337
    %v339 = vcombine.high %v331, %v331
    %v340 = vcombine.high %v338, %v338
    %v349 = vpack.c.bf16 %v314, %v314
    %v350 = vpack.c.bf16 %v322, %v322
    %v351 = vpack.c.bf16 %v321, %v321
    %v352 = vpack.c.bf16 %v323, %v323
    %v353 = vpack.c.bf16 %v331, %v331
    %v354 = vpack.c.bf16 %v339, %v339
    %v355 = vpack.c.bf16 %v338, %v338
    %v356 = vpack.c.bf16 %v340, %v340
    %v357 = vld [vmem:[#allocation2 + $0x800] sm:$0x11]
    %v358 = vld [vmem:[#allocation2 + $0x808] sm:$0x11]
    %v359 = vunpack.c.l.bf16 %v357
    %v360 = vunpack.c.h.bf16 %v357
    %v361 = vunpack.c.l.bf16 %v358
    %v362 = vunpack.c.h.bf16 %v358
    %v363 = vlaneseq
    %v364 = vshrl.u32 %v363, 7
    %v365 = vsub.s32 0, %v364
    %v366 = vrot.slane %v359, %v365
    %v367 = vlaneseq
    %v368 = vshrl.u32 %v367, 7
    %v369 = vsub.s32 0, %v368
    %v370 = vrot.slane %v360, %v369
    %v371 = vlaneseq
    %v372 = vshrl.u32 %v371, 7
    %v373 = vsub.s32 0, %v372
    %v374 = vrot.slane %v361, %v373
    %v375 = vlaneseq
    %v376 = vshrl.u32 %v375, 7
    %v377 = vsub.s32 0, %v376
    %v378 = vrot.slane %v362, %v377
    %v635 = vunpack.c.l.b16 %v49
    %v636 = vunpack.c.h.b16 %v49
    %v637 = vunpack.c.l.b16 %v50
    %v638 = vunpack.c.h.b16 %v50
    %v639 = vunpack.c.l.b16 %v51
    %v640 = vunpack.c.h.b16 %v51
    %v641 = vunpack.c.l.b16 %v52
    %v642 = vunpack.c.h.b16 %v52
    %v643 = vunpack.c.l.b16 %v53
    %v644 = vunpack.c.h.b16 %v53
    %v645 = vunpack.c.l.b16 %v54
    %v646 = vunpack.c.h.b16 %v54
    %v647 = vunpack.c.l.b16 %v55
    %v648 = vunpack.c.h.b16 %v55
    %v649 = vunpack.c.l.b16 %v56
    %v650 = vunpack.c.h.b16 %v56
    %v651 = vunpack.c.l.b16 %v57
    %v652 = vunpack.c.h.b16 %v57
    %v653 = vunpack.c.l.b16 %v58
    %v654 = vunpack.c.h.b16 %v58
    %v655 = vunpack.c.l.b16 %v59
    %v656 = vunpack.c.h.b16 %v59
    %v657 = vunpack.c.l.b16 %v60
    %v658 = vunpack.c.h.b16 %v60
    %v659 = vunpack.c.l.b16 %v61
    %v660 = vunpack.c.h.b16 %v61
    %v661 = vunpack.c.l.b16 %v62
    %v662 = vunpack.c.h.b16 %v62
    %v663 = vunpack.c.l.b16 %v63
    %v664 = vunpack.c.h.b16 %v63
    %v665 = vunpack.c.l.b16 %v64
    %v666 = vunpack.c.h.b16 %v64
    %v667 = vunpack.c.l.b16 %v65
    %v668 = vunpack.c.h.b16 %v65
    %v669 = vunpack.c.l.b16 %v66
    %v670 = vunpack.c.h.b16 %v66
    %v671 = vunpack.c.l.b16 %v67
    %v672 = vunpack.c.h.b16 %v67
    %v673 = vunpack.c.l.b16 %v68
    %v674 = vunpack.c.h.b16 %v68
    %v675 = vunpack.c.l.b16 %v69
    %v676 = vunpack.c.h.b16 %v69
    %v677 = vunpack.c.l.b16 %v70
    %v678 = vunpack.c.h.b16 %v70
    %v679 = vunpack.c.l.b16 %v71
    %v680 = vunpack.c.h.b16 %v71
    %v681 = vunpack.c.l.b16 %v72
    %v682 = vunpack.c.h.b16 %v72
    %v683 = vunpack.c.l.b16 %v73
    %v684 = vunpack.c.h.b16 %v73
    %v685 = vunpack.c.l.b16 %v74
    %v686 = vunpack.c.h.b16 %v74
    %v687 = vunpack.c.l.b16 %v75
    %v688 = vunpack.c.h.b16 %v75
    %v689 = vunpack.c.l.b16 %v76
    %v690 = vunpack.c.h.b16 %v76
    %v691 = vunpack.c.l.b16 %v77
    %v692 = vunpack.c.h.b16 %v77
    %v693 = vunpack.c.l.b16 %v78
    %v694 = vunpack.c.h.b16 %v78
    %v695 = vunpack.c.l.b16 %v79
    %v696 = vunpack.c.h.b16 %v79
    %v697 = vunpack.c.l.b16 %v80
    %v698 = vunpack.c.h.b16 %v80
    %v699 = vunpack.c.l.b16 %v81
    %v700 = vunpack.c.h.b16 %v81
    %v701 = vunpack.c.l.b16 %v82
    %v702 = vunpack.c.h.b16 %v82
    %v703 = vunpack.c.l.b16 %v83
    %v704 = vunpack.c.h.b16 %v83
    %v705 = vunpack.c.l.b16 %v84
    %v706 = vunpack.c.h.b16 %v84
    %v707 = vunpack.c.l.b16 %v85
    %v708 = vunpack.c.h.b16 %v85
    %v709 = vunpack.c.l.b16 %v86
    %v710 = vunpack.c.h.b16 %v86
    %v711 = vunpack.c.l.b16 %v87
    %v712 = vunpack.c.h.b16 %v87
    %v713 = vunpack.c.l.b16 %v88
    %v714 = vunpack.c.h.b16 %v88
    %v715 = vunpack.c.l.b16 %v89
    %v716 = vunpack.c.h.b16 %v89
    %v717 = vunpack.c.l.b16 %v90
    %v718 = vunpack.c.h.b16 %v90
    %v719 = vunpack.c.l.b16 %v91
    %v720 = vunpack.c.h.b16 %v91
    %v721 = vunpack.c.l.b16 %v92
    %v722 = vunpack.c.h.b16 %v92
    %v723 = vunpack.c.l.b16 %v93
    %v724 = vunpack.c.h.b16 %v93
    %v725 = vunpack.c.l.b16 %v94
    %v726 = vunpack.c.h.b16 %v94
    %v727 = vunpack.c.l.b16 %v95
    %v728 = vunpack.c.h.b16 %v95
    %v729 = vunpack.c.l.b16 %v96
    %v730 = vunpack.c.h.b16 %v96
    %v731 = vunpack.c.l.b16 %v97
    %v732 = vunpack.c.h.b16 %v97
    %v733 = vunpack.c.l.b16 %v98
    %v734 = vunpack.c.h.b16 %v98
    %v735 = vunpack.c.l.b16 %v99
    %v736 = vunpack.c.h.b16 %v99
    %v737 = vunpack.c.l.b16 %v100
    %v738 = vunpack.c.h.b16 %v100
    %v739 = vunpack.c.l.b16 %v101
    %v740 = vunpack.c.h.b16 %v101
    %v741 = vunpack.c.l.b16 %v102
    %v742 = vunpack.c.h.b16 %v102
    %v743 = vunpack.c.l.b16 %v103
    %v744 = vunpack.c.h.b16 %v103
    %v745 = vunpack.c.l.b16 %v104
    %v746 = vunpack.c.h.b16 %v104
    %v747 = vunpack.c.l.b16 %v105
    %v748 = vunpack.c.h.b16 %v105
    %v749 = vunpack.c.l.b16 %v106
    %v750 = vunpack.c.h.b16 %v106
    %v751 = vunpack.c.l.b16 %v107
    %v752 = vunpack.c.h.b16 %v107
    %v753 = vunpack.c.l.b16 %v108
    %v754 = vunpack.c.h.b16 %v108
    %v755 = vunpack.c.l.b16 %v109
    %v756 = vunpack.c.h.b16 %v109
    %v757 = vunpack.c.l.b16 %v110
    %v758 = vunpack.c.h.b16 %v110
    %v759 = vunpack.c.l.b16 %v111
    %v760 = vunpack.c.h.b16 %v111
    %v761 = vunpack.c.l.b16 %v112
    %v762 = vunpack.c.h.b16 %v112
    %v763 = vunpack.c.l.b16 %v113
    %v764 = vunpack.c.h.b16 %v113
    %v765 = vunpack.c.l.b16 %v114
    %v766 = vunpack.c.h.b16 %v114
    %v767 = vunpack.c.l.b16 %v115
    %v768 = vunpack.c.h.b16 %v115
    %v769 = vunpack.c.l.b16 %v116
    %v770 = vunpack.c.h.b16 %v116
    %v771 = vunpack.c.l.b16 %v117
    %v772 = vunpack.c.h.b16 %v117
    %v773 = vunpack.c.l.b16 %v118
    %v774 = vunpack.c.h.b16 %v118
    %v775 = vunpack.c.l.b16 %v119
    %v776 = vunpack.c.h.b16 %v119
    %v777 = vunpack.c.l.b16 %v120
    %v778 = vunpack.c.h.b16 %v120
    %v779 = vunpack.c.l.b16 %v121
    %v780 = vunpack.c.h.b16 %v121
    %v781 = vunpack.c.l.b16 %v122
    %v782 = vunpack.c.h.b16 %v122
    %v783 = vunpack.c.l.b16 %v123
    %v784 = vunpack.c.h.b16 %v123
    %v785 = vunpack.c.l.b16 %v124
    %v786 = vunpack.c.h.b16 %v124
    %v787 = vunpack.c.l.b16 %v125
    %v788 = vunpack.c.h.b16 %v125
    %v789 = vunpack.c.l.b16 %v126
    %v790 = vunpack.c.h.b16 %v126
    %v791 = vunpack.c.l.b16 %v127
    %v792 = vunpack.c.h.b16 %v127
    %v793 = vunpack.c.l.b16 %v128
    %v794 = vunpack.c.h.b16 %v128
    %v795 = vunpack.c.l.b16 %v129
    %v796 = vunpack.c.h.b16 %v129
    %v797 = vunpack.c.l.b16 %v130
    %v798 = vunpack.c.h.b16 %v130
    %v799 = vunpack.c.l.b16 %v131
    %v800 = vunpack.c.h.b16 %v131
    %v801 = vunpack.c.l.b16 %v132
    %v802 = vunpack.c.h.b16 %v132
    %v803 = vunpack.c.l.b16 %v133
    %v804 = vunpack.c.h.b16 %v133
    %v805 = vunpack.c.l.b16 %v134
    %v806 = vunpack.c.h.b16 %v134
    %v807 = vunpack.c.l.b16 %v135
    %v808 = vunpack.c.h.b16 %v135
    %v809 = vunpack.c.l.b16 %v136
    %v810 = vunpack.c.h.b16 %v136
    %v811 = vunpack.c.l.b16 %v137
    %v812 = vunpack.c.h.b16 %v137
    %v813 = vunpack.c.l.b16 %v138
    %v814 = vunpack.c.h.b16 %v138
    %v815 = vunpack.c.l.b16 %v139
    %v816 = vunpack.c.h.b16 %v139
    %v817 = vunpack.c.l.b16 %v140
    %v818 = vunpack.c.h.b16 %v140
    %v819 = vunpack.c.l.b16 %v141
    %v820 = vunpack.c.h.b16 %v141
    %v821 = vunpack.c.l.b16 %v142
    %v822 = vunpack.c.h.b16 %v142
    %v823 = vunpack.c.l.b16 %v143
    %v824 = vunpack.c.h.b16 %v143
    %v825 = vunpack.c.l.b16 %v144
    %v826 = vunpack.c.h.b16 %v144
    %v827 = vunpack.c.l.b16 %v145
    %v828 = vunpack.c.h.b16 %v145
    %v829 = vunpack.c.l.b16 %v146
    %v830 = vunpack.c.h.b16 %v146
    %v831 = vunpack.c.l.b16 %v147
    %v832 = vunpack.c.h.b16 %v147
    %v833 = vunpack.c.l.b16 %v148
    %v834 = vunpack.c.h.b16 %v148
    %v835 = vunpack.c.l.b16 %v149
    %v836 = vunpack.c.h.b16 %v149
    %v837 = vunpack.c.l.b16 %v150
    %v838 = vunpack.c.h.b16 %v150
    %v839 = vunpack.c.l.b16 %v151
    %v840 = vunpack.c.h.b16 %v151
    %v841 = vunpack.c.l.b16 %v152
    %v842 = vunpack.c.h.b16 %v152
    %v843 = vunpack.c.l.b16 %v153
    %v844 = vunpack.c.h.b16 %v153
    %v845 = vunpack.c.l.b16 %v154
    %v846 = vunpack.c.h.b16 %v154
    %v847 = vunpack.c.l.b16 %v155
    %v848 = vunpack.c.h.b16 %v155
    %v849 = vunpack.c.l.b16 %v156
    %v850 = vunpack.c.h.b16 %v156
    %v851 = vunpack.c.l.b16 %v157
    %v852 = vunpack.c.h.b16 %v157
    %v853 = vunpack.c.l.b16 %v158
    %v854 = vunpack.c.h.b16 %v158
    %v855 = vunpack.c.l.b16 %v159
    %v856 = vunpack.c.h.b16 %v159
    %v857 = vunpack.c.l.b16 %v160
    %v858 = vunpack.c.h.b16 %v160
    %v859 = vunpack.c.l.b16 %v161
    %v860 = vunpack.c.h.b16 %v161
    %v861 = vunpack.c.l.b16 %v162
    %v862 = vunpack.c.h.b16 %v162
    %v863 = vunpack.c.l.b16 %v163
    %v864 = vunpack.c.h.b16 %v163
    %v865 = vunpack.c.l.b16 %v164
    %v866 = vunpack.c.h.b16 %v164
    %v867 = vunpack.c.l.b16 %v165
    %v868 = vunpack.c.h.b16 %v165
    %v869 = vunpack.c.l.b16 %v166
    %v870 = vunpack.c.h.b16 %v166
    %v871 = vunpack.c.l.b16 %v167
    %v872 = vunpack.c.h.b16 %v167
    %v873 = vunpack.c.l.b16 %v168
    %v874 = vunpack.c.h.b16 %v168
    %v875 = vunpack.c.l.b16 %v169
    %v876 = vunpack.c.h.b16 %v169
    %v877 = vunpack.c.l.b16 %v170
    %v878 = vunpack.c.h.b16 %v170
    %v879 = vunpack.c.l.b16 %v171
    %v880 = vunpack.c.h.b16 %v171
    %v881 = vunpack.c.l.b16 %v172
    %v882 = vunpack.c.h.b16 %v172
    %v883 = vunpack.c.l.b16 %v173
    %v884 = vunpack.c.h.b16 %v173
    %v885 = vunpack.c.l.b16 %v174
    %v886 = vunpack.c.h.b16 %v174
    %v887 = vunpack.c.l.b16 %v175
    %v888 = vunpack.c.h.b16 %v175
    %v889 = vunpack.c.l.b16 %v176
    %v890 = vunpack.c.h.b16 %v176
    %v891 = vunpack.c.l.b16 %v177
    %v892 = vunpack.c.h.b16 %v177
    %v893 = vunpack.c.l.b16 %v178
    %v894 = vunpack.c.h.b16 %v178
    %v895 = vunpack.c.l.b16 %v179
    %v896 = vunpack.c.h.b16 %v179
    %v897 = vunpack.c.l.b16 %v180
    %v898 = vunpack.c.h.b16 %v180
    %v899 = vunpack.c.l.b16 %v181
    %v900 = vunpack.c.h.b16 %v181
    %v901 = vunpack.c.l.b16 %v182
    %v902 = vunpack.c.h.b16 %v182
    %v903 = vunpack.c.l.b16 %v183
    %v904 = vunpack.c.h.b16 %v183
    %v905 = vunpack.c.l.b16 %v184
    %v906 = vunpack.c.h.b16 %v184
    %v907 = vunpack.c.l.b16 %v185
    %v908 = vunpack.c.h.b16 %v185
    %v909 = vunpack.c.l.b16 %v186
    %v910 = vunpack.c.h.b16 %v186
    %v911 = vunpack.c.l.b16 %v187
    %v912 = vunpack.c.h.b16 %v187
    %v913 = vunpack.c.l.b16 %v188
    %v914 = vunpack.c.h.b16 %v188
    %v915 = vunpack.c.l.b16 %v189
    %v916 = vunpack.c.h.b16 %v189
    %v917 = vunpack.c.l.b16 %v190
    %v918 = vunpack.c.h.b16 %v190
    %v919 = vunpack.c.l.b16 %v191
    %v920 = vunpack.c.h.b16 %v191
    %v921 = vunpack.c.l.b16 %v192
    %v922 = vunpack.c.h.b16 %v192
    %v923 = vunpack.c.l.b16 %v193
    %v924 = vunpack.c.h.b16 %v193
    %v925 = vunpack.c.l.b16 %v194
    %v926 = vunpack.c.h.b16 %v194
    %v927 = vunpack.c.l.b16 %v195
    %v928 = vunpack.c.h.b16 %v195
    %v929 = vunpack.c.l.b16 %v196
    %v930 = vunpack.c.h.b16 %v196
    %v931 = vunpack.c.l.b16 %v197
    %v932 = vunpack.c.h.b16 %v197
    %v933 = vunpack.c.l.b16 %v198
    %v934 = vunpack.c.h.b16 %v198
    %v935 = vunpack.c.l.b16 %v199
    %v936 = vunpack.c.h.b16 %v199
    %v937 = vunpack.c.l.b16 %v200
    %v938 = vunpack.c.h.b16 %v200
    %v939 = vunpack.c.l.b16 %v201
    %v940 = vunpack.c.h.b16 %v201
    %v941 = vunpack.c.l.b16 %v202
    %v942 = vunpack.c.h.b16 %v202
    %v943 = vunpack.c.l.b16 %v203
    %v944 = vunpack.c.h.b16 %v203
    %v945 = vunpack.c.l.b16 %v204
    %v946 = vunpack.c.h.b16 %v204
    %v947 = vunpack.c.l.b16 %v205
    %v948 = vunpack.c.h.b16 %v205
    %v949 = vunpack.c.l.b16 %v206
    %v950 = vunpack.c.h.b16 %v206
    %v951 = vunpack.c.l.b16 %v207
    %v952 = vunpack.c.h.b16 %v207
    %v953 = vunpack.c.l.b16 %v208
    %v954 = vunpack.c.h.b16 %v208
    %v955 = vunpack.c.l.b16 %v209
    %v956 = vunpack.c.h.b16 %v209
    %v957 = vunpack.c.l.b16 %v210
    %v958 = vunpack.c.h.b16 %v210
    %v959 = vunpack.c.l.b16 %v211
    %v960 = vunpack.c.h.b16 %v211
    %v961 = vunpack.c.l.b16 %v212
    %v962 = vunpack.c.h.b16 %v212
    %v963 = vunpack.c.l.b16 %v213
    %v964 = vunpack.c.h.b16 %v213
    %v965 = vunpack.c.l.b16 %v214
    %v966 = vunpack.c.h.b16 %v214
    %v967 = vunpack.c.l.b16 %v215
    %v968 = vunpack.c.h.b16 %v215
    %v969 = vunpack.c.l.b16 %v216
    %v970 = vunpack.c.h.b16 %v216
    %v971 = vunpack.c.l.b16 %v217
    %v972 = vunpack.c.h.b16 %v217
    %v973 = vunpack.c.l.b16 %v218
    %v974 = vunpack.c.h.b16 %v218
    %v975 = vunpack.c.l.b16 %v219
    %v976 = vunpack.c.h.b16 %v219
    %v977 = vunpack.c.l.b16 %v220
    %v978 = vunpack.c.h.b16 %v220
    %v979 = vunpack.c.l.b16 %v221
    %v980 = vunpack.c.h.b16 %v221
    %v981 = vunpack.c.l.b16 %v222
    %v982 = vunpack.c.h.b16 %v222
    %v983 = vunpack.c.l.b16 %v223
    %v984 = vunpack.c.h.b16 %v223
    %v985 = vunpack.c.l.b16 %v224
    %v986 = vunpack.c.h.b16 %v224
    %v987 = vunpack.c.l.b16 %v225
    %v988 = vunpack.c.h.b16 %v225
    %v989 = vunpack.c.l.b16 %v226
    %v990 = vunpack.c.h.b16 %v226
    %v991 = vunpack.c.l.b16 %v227
    %v992 = vunpack.c.h.b16 %v227
    %v993 = vunpack.c.l.b16 %v228
    %v994 = vunpack.c.h.b16 %v228
    %v995 = vunpack.c.l.b16 %v229
    %v996 = vunpack.c.h.b16 %v229
    %v997 = vunpack.c.l.b16 %v230
    %v998 = vunpack.c.h.b16 %v230
    %v999 = vunpack.c.l.b16 %v231
    %v1000 = vunpack.c.h.b16 %v231
    %v1001 = vunpack.c.l.b16 %v232
    %v1002 = vunpack.c.h.b16 %v232
    %v1003 = vunpack.c.l.b16 %v233
    %v1004 = vunpack.c.h.b16 %v233
    %v1005 = vunpack.c.l.b16 %v234
    %v1006 = vunpack.c.h.b16 %v234
    %v1007 = vunpack.c.l.b16 %v235
    %v1008 = vunpack.c.h.b16 %v235
    %v1009 = vunpack.c.l.b16 %v236
    %v1010 = vunpack.c.h.b16 %v236
    %v1011 = vunpack.c.l.b16 %v237
    %v1012 = vunpack.c.h.b16 %v237
    %v1013 = vunpack.c.l.b16 %v238
    %v1014 = vunpack.c.h.b16 %v238
    %v1015 = vunpack.c.l.b16 %v239
    %v1016 = vunpack.c.h.b16 %v239
    %v1017 = vunpack.c.l.b16 %v240
    %v1018 = vunpack.c.h.b16 %v240
    %v1019 = vunpack.c.l.b16 %v241
    %v1020 = vunpack.c.h.b16 %v241
    %v1021 = vunpack.c.l.b16 %v242
    %v1022 = vunpack.c.h.b16 %v242
    %v1023 = vunpack.c.l.b16 %v243
    %v1024 = vunpack.c.h.b16 %v243
    %v1025 = vunpack.c.l.b16 %v244
    %v1026 = vunpack.c.h.b16 %v244
    %v1027 = vunpack.c.l.b16 %v245
    %v1028 = vunpack.c.h.b16 %v245
    %v1029 = vunpack.c.l.b16 %v246
    %v1030 = vunpack.c.h.b16 %v246
    %v1031 = vunpack.c.l.b16 %v247
    %v1032 = vunpack.c.h.b16 %v247
    %v1033 = vunpack.c.l.b16 %v248
    %v1034 = vunpack.c.h.b16 %v248
    %v1035 = vunpack.c.l.b16 %v249
    %v1036 = vunpack.c.h.b16 %v249
    %v1037 = vunpack.c.l.b16 %v250
    %v1038 = vunpack.c.h.b16 %v250
    %v1039 = vunpack.c.l.b16 %v251
    %v1040 = vunpack.c.h.b16 %v251
    %v1041 = vunpack.c.l.b16 %v252
    %v1042 = vunpack.c.h.b16 %v252
    %v1043 = vunpack.c.l.b16 %v253
    %v1044 = vunpack.c.h.b16 %v253
    %v1045 = vunpack.c.l.b16 %v254
    %v1046 = vunpack.c.h.b16 %v254
    %v1047 = vunpack.c.l.b16 %v255
    %v1048 = vunpack.c.h.b16 %v255
    %v1049 = vunpack.c.l.b16 %v256
    %v1050 = vunpack.c.h.b16 %v256
    %v1051 = vunpack.c.l.b16 %v257
    %v1052 = vunpack.c.h.b16 %v257
    %v1053 = vunpack.c.l.b16 %v258
    %v1054 = vunpack.c.h.b16 %v258
    %v1055 = vunpack.c.l.b16 %v259
    %v1056 = vunpack.c.h.b16 %v259
    %v1057 = vunpack.c.l.b16 %v260
    %v1058 = vunpack.c.h.b16 %v260
    %v1059 = vunpack.c.l.b16 %v261
    %v1060 = vunpack.c.h.b16 %v261
    %v1061 = vunpack.c.l.b16 %v262
    %v1062 = vunpack.c.h.b16 %v262
    %v1063 = vunpack.c.l.b16 %v263
    %v1064 = vunpack.c.h.b16 %v263
    %v1065 = vunpack.c.l.b16 %v264
    %v1066 = vunpack.c.h.b16 %v264
    %v1067 = vunpack.c.l.b16 %v265
    %v1068 = vunpack.c.h.b16 %v265
    %v1069 = vunpack.c.l.b16 %v266
    %v1070 = vunpack.c.h.b16 %v266
    %v1071 = vunpack.c.l.b16 %v267
    %v1072 = vunpack.c.h.b16 %v267
    %v1073 = vunpack.c.l.b16 %v268
    %v1074 = vunpack.c.h.b16 %v268
    %v1075 = vunpack.c.l.b16 %v269
    %v1076 = vunpack.c.h.b16 %v269
    %v1077 = vunpack.c.l.b16 %v270
    %v1078 = vunpack.c.h.b16 %v270
    %v1079 = vunpack.c.l.b16 %v271
    %v1080 = vunpack.c.h.b16 %v271
    %v1081 = vunpack.c.l.b16 %v272
    %v1082 = vunpack.c.h.b16 %v272
    %v1083 = vunpack.c.l.b16 %v273
    %v1084 = vunpack.c.h.b16 %v273
    %v1085 = vunpack.c.l.b16 %v274
    %v1086 = vunpack.c.h.b16 %v274
    %v1087 = vunpack.c.l.b16 %v275
    %v1088 = vunpack.c.h.b16 %v275
    %v1089 = vunpack.c.l.b16 %v276
    %v1090 = vunpack.c.h.b16 %v276
    %v1091 = vunpack.c.l.b16 %v277
    %v1092 = vunpack.c.h.b16 %v277
    %v1093 = vunpack.c.l.b16 %v278
    %v1094 = vunpack.c.h.b16 %v278
    %v1095 = vunpack.c.l.b16 %v279
    %v1096 = vunpack.c.h.b16 %v279
    %v1097 = vunpack.c.l.b16 %v280
    %v1098 = vunpack.c.h.b16 %v280
    %v1099 = vunpack.c.l.b16 %v281
    %v1100 = vunpack.c.h.b16 %v281
    %v1101 = vunpack.c.l.b16 %v282
    %v1102 = vunpack.c.h.b16 %v282
    %v1103 = vunpack.c.l.b16 %v283
    %v1104 = vunpack.c.h.b16 %v283
    %v1105 = vunpack.c.l.b16 %v284
    %v1106 = vunpack.c.h.b16 %v284
    %v1107 = vunpack.c.l.b16 %v285
    %v1108 = vunpack.c.h.b16 %v285
    %v1109 = vunpack.c.l.b16 %v286
    %v1110 = vunpack.c.h.b16 %v286
    %v1111 = vunpack.c.l.b16 %v287
    %v1112 = vunpack.c.h.b16 %v287
    %v1113 = vunpack.c.l.b16 %v288
    %v1114 = vunpack.c.h.b16 %v288
    %v1115 = vunpack.c.l.b16 %v289
    %v1116 = vunpack.c.h.b16 %v289
    %v1117 = vunpack.c.l.b16 %v290
    %v1118 = vunpack.c.h.b16 %v290
    %v1119 = vunpack.c.l.b16 %v291
    %v1120 = vunpack.c.h.b16 %v291
    %v1121 = vunpack.c.l.b16 %v292
    %v1122 = vunpack.c.h.b16 %v292
    %v1123 = vunpack.c.l.b16 %v293
    %v1124 = vunpack.c.h.b16 %v293
    %v1125 = vunpack.c.l.b16 %v294
    %v1126 = vunpack.c.h.b16 %v294
    %v1127 = vunpack.c.l.b16 %v295
    %v1128 = vunpack.c.h.b16 %v295
    %v1129 = vunpack.c.l.b16 %v296
    %v1130 = vunpack.c.h.b16 %v296
    %v1131 = vunpack.c.l.b16 %v297
    %v1132 = vunpack.c.h.b16 %v297
    %v1133 = vunpack.c.l.b16 %v298
    %v1134 = vunpack.c.h.b16 %v298
    %v1135 = vunpack.c.l.b16 %v299
    %v1136 = vunpack.c.h.b16 %v299
    %v1137 = vunpack.c.l.b16 %v300
    %v1138 = vunpack.c.h.b16 %v300
    %v1139 = vunpack.c.l.b16 %v301
    %v1140 = vunpack.c.h.b16 %v301
    %v1141 = vunpack.c.l.b16 %v302
    %v1142 = vunpack.c.h.b16 %v302
    %v1143 = vunpack.c.l.b16 %v303
    %v1144 = vunpack.c.h.b16 %v303
    %v1145 = vunpack.c.l.b16 %v304
    %v1146 = vunpack.c.h.b16 %v304
    %v1147 = vpack.c.b16 %v639, %v635
    %v1148 = vpack.c.b16 %v640, %v636
    %v1149 = vpack.c.b16 %v641, %v637
    %v1150 = vpack.c.b16 %v642, %v638
    %v1151 = vpack.c.b16 %v647, %v643
    %v1152 = vpack.c.b16 %v648, %v644
    %v1153 = vpack.c.b16 %v649, %v645
    %v1154 = vpack.c.b16 %v650, %v646
    %v1155 = vpack.c.b16 %v655, %v651
    %v1156 = vpack.c.b16 %v656, %v652
    %v1157 = vpack.c.b16 %v657, %v653
    %v1158 = vpack.c.b16 %v658, %v654
    %v1159 = vpack.c.b16 %v663, %v659
    %v1160 = vpack.c.b16 %v664, %v660
    %v1161 = vpack.c.b16 %v665, %v661
    %v1162 = vpack.c.b16 %v666, %v662
    %v1163 = vpack.c.b16 %v671, %v667
    %v1164 = vpack.c.b16 %v672, %v668
    %v1165 = vpack.c.b16 %v673, %v669
    %v1166 = vpack.c.b16 %v674, %v670
    %v1167 = vpack.c.b16 %v679, %v675
    %v1168 = vpack.c.b16 %v680, %v676
    %v1169 = vpack.c.b16 %v681, %v677
    %v1170 = vpack.c.b16 %v682, %v678
    %v1171 = vpack.c.b16 %v687, %v683
    %v1172 = vpack.c.b16 %v688, %v684
    %v1173 = vpack.c.b16 %v689, %v685
    %v1174 = vpack.c.b16 %v690, %v686
    %v1175 = vpack.c.b16 %v695, %v691
    %v1176 = vpack.c.b16 %v696, %v692
    %v1177 = vpack.c.b16 %v697, %v693
    %v1178 = vpack.c.b16 %v698, %v694
    %v1179 = vpack.c.b16 %v703, %v699
    %v1180 = vpack.c.b16 %v704, %v700
    %v1181 = vpack.c.b16 %v705, %v701
    %v1182 = vpack.c.b16 %v706, %v702
    %v1183 = vpack.c.b16 %v711, %v707
    %v1184 = vpack.c.b16 %v712, %v708
    %v1185 = vpack.c.b16 %v713, %v709
    %v1186 = vpack.c.b16 %v714, %v710
    %v1187 = vpack.c.b16 %v719, %v715
    %v1188 = vpack.c.b16 %v720, %v716
    %v1189 = vpack.c.b16 %v721, %v717
    %v1190 = vpack.c.b16 %v722, %v718
    %v1191 = vpack.c.b16 %v727, %v723
    %v1192 = vpack.c.b16 %v728, %v724
    %v1193 = vpack.c.b16 %v729, %v725
    %v1194 = vpack.c.b16 %v730, %v726
    %v1195 = vpack.c.b16 %v735, %v731
    %v1196 = vpack.c.b16 %v736, %v732
    %v1197 = vpack.c.b16 %v737, %v733
    %v1198 = vpack.c.b16 %v738, %v734
    %v1199 = vpack.c.b16 %v743, %v739
    %v1200 = vpack.c.b16 %v744, %v740
    %v1201 = vpack.c.b16 %v745, %v741
    %v1202 = vpack.c.b16 %v746, %v742
    %v1203 = vpack.c.b16 %v751, %v747
    %v1204 = vpack.c.b16 %v752, %v748
    %v1205 = vpack.c.b16 %v753, %v749
    %v1206 = vpack.c.b16 %v754, %v750
    %v1207 = vpack.c.b16 %v759, %v755
    %v1208 = vpack.c.b16 %v760, %v756
    %v1209 = vpack.c.b16 %v761, %v757
    %v1210 = vpack.c.b16 %v762, %v758
    %v1211 = vpack.c.b16 %v767, %v763
    %v1212 = vpack.c.b16 %v768, %v764
    %v1213 = vpack.c.b16 %v769, %v765
    %v1214 = vpack.c.b16 %v770, %v766
    %v1215 = vpack.c.b16 %v775, %v771
    %v1216 = vpack.c.b16 %v776, %v772
    %v1217 = vpack.c.b16 %v777, %v773
    %v1218 = vpack.c.b16 %v778, %v774
    %v1219 = vpack.c.b16 %v783, %v779
    %v1220 = vpack.c.b16 %v784, %v780
    %v1221 = vpack.c.b16 %v785, %v781
    %v1222 = vpack.c.b16 %v786, %v782
    %v1223 = vpack.c.b16 %v791, %v787
    %v1224 = vpack.c.b16 %v792, %v788
    %v1225 = vpack.c.b16 %v793, %v789
    %v1226 = vpack.c.b16 %v794, %v790
    %v1227 = vpack.c.b16 %v799, %v795
    %v1228 = vpack.c.b16 %v800, %v796
    %v1229 = vpack.c.b16 %v801, %v797
    %v1230 = vpack.c.b16 %v802, %v798
    %v1231 = vpack.c.b16 %v807, %v803
    %v1232 = vpack.c.b16 %v808, %v804
    %v1233 = vpack.c.b16 %v809, %v805
    %v1234 = vpack.c.b16 %v810, %v806
    %v1235 = vpack.c.b16 %v815, %v811
    %v1236 = vpack.c.b16 %v816, %v812
    %v1237 = vpack.c.b16 %v817, %v813
    %v1238 = vpack.c.b16 %v818, %v814
    %v1239 = vpack.c.b16 %v823, %v819
    %v1240 = vpack.c.b16 %v824, %v820
    %v1241 = vpack.c.b16 %v825, %v821
    %v1242 = vpack.c.b16 %v826, %v822
    %v1243 = vpack.c.b16 %v831, %v827
    %v1244 = vpack.c.b16 %v832, %v828
    %v1245 = vpack.c.b16 %v833, %v829
    %v1246 = vpack.c.b16 %v834, %v830
    %v1247 = vpack.c.b16 %v839, %v835
    %v1248 = vpack.c.b16 %v840, %v836
    %v1249 = vpack.c.b16 %v841, %v837
    %v1250 = vpack.c.b16 %v842, %v838
    %v1251 = vpack.c.b16 %v847, %v843
    %v1252 = vpack.c.b16 %v848, %v844
    %v1253 = vpack.c.b16 %v849, %v845
    %v1254 = vpack.c.b16 %v850, %v846
    %v1255 = vpack.c.b16 %v855, %v851
    %v1256 = vpack.c.b16 %v856, %v852
    %v1257 = vpack.c.b16 %v857, %v853
    %v1258 = vpack.c.b16 %v858, %v854
    %v1259 = vpack.c.b16 %v863, %v859
    %v1260 = vpack.c.b16 %v864, %v860
    %v1261 = vpack.c.b16 %v865, %v861
    %v1262 = vpack.c.b16 %v866, %v862
    %v1263 = vpack.c.b16 %v871, %v867
    %v1264 = vpack.c.b16 %v872, %v868
    %v1265 = vpack.c.b16 %v873, %v869
    %v1266 = vpack.c.b16 %v874, %v870
    %v1267 = vpack.c.b16 %v879, %v875
    %v1268 = vpack.c.b16 %v880, %v876
    %v1269 = vpack.c.b16 %v881, %v877
    %v1270 = vpack.c.b16 %v882, %v878
    %v1271 = vpack.c.b16 %v887, %v883
    %v1272 = vpack.c.b16 %v888, %v884
    %v1273 = vpack.c.b16 %v889, %v885
    %v1274 = vpack.c.b16 %v890, %v886
    %v1275 = vpack.c.b16 %v895, %v891
    %v1276 = vpack.c.b16 %v896, %v892
    %v1277 = vpack.c.b16 %v897, %v893
    %v1278 = vpack.c.b16 %v898, %v894
    %v1279 = vpack.c.b16 %v903, %v899
    %v1280 = vpack.c.b16 %v904, %v900
    %v1281 = vpack.c.b16 %v905, %v901
    %v1282 = vpack.c.b16 %v906, %v902
    %v1283 = vpack.c.b16 %v911, %v907
    %v1284 = vpack.c.b16 %v912, %v908
    %v1285 = vpack.c.b16 %v913, %v909
    %v1286 = vpack.c.b16 %v914, %v910
    %v1287 = vpack.c.b16 %v919, %v915
    %v1288 = vpack.c.b16 %v920, %v916
    %v1289 = vpack.c.b16 %v921, %v917
    %v1290 = vpack.c.b16 %v922, %v918
    %v1291 = vpack.c.b16 %v927, %v923
    %v1292 = vpack.c.b16 %v928, %v924
    %v1293 = vpack.c.b16 %v929, %v925
    %v1294 = vpack.c.b16 %v930, %v926
    %v1295 = vpack.c.b16 %v935, %v931
    %v1296 = vpack.c.b16 %v936, %v932
    %v1297 = vpack.c.b16 %v937, %v933
    %v1298 = vpack.c.b16 %v938, %v934
    %v1299 = vpack.c.b16 %v943, %v939
    %v1300 = vpack.c.b16 %v944, %v940
    %v1301 = vpack.c.b16 %v945, %v941
    %v1302 = vpack.c.b16 %v946, %v942
    %v1303 = vpack.c.b16 %v951, %v947
    %v1304 = vpack.c.b16 %v952, %v948
    %v1305 = vpack.c.b16 %v953, %v949
    %v1306 = vpack.c.b16 %v954, %v950
    %v1307 = vpack.c.b16 %v959, %v955
    %v1308 = vpack.c.b16 %v960, %v956
    %v1309 = vpack.c.b16 %v961, %v957
    %v1310 = vpack.c.b16 %v962, %v958
    %v1311 = vpack.c.b16 %v967, %v963
    %v1312 = vpack.c.b16 %v968, %v964
    %v1313 = vpack.c.b16 %v969, %v965
    %v1314 = vpack.c.b16 %v970, %v966
    %v1315 = vpack.c.b16 %v975, %v971
    %v1316 = vpack.c.b16 %v976, %v972
    %v1317 = vpack.c.b16 %v977, %v973
    %v1318 = vpack.c.b16 %v978, %v974
    %v1319 = vpack.c.b16 %v983, %v979
    %v1320 = vpack.c.b16 %v984, %v980
    %v1321 = vpack.c.b16 %v985, %v981
    %v1322 = vpack.c.b16 %v986, %v982
    %v1323 = vpack.c.b16 %v991, %v987
    %v1324 = vpack.c.b16 %v992, %v988
    %v1325 = vpack.c.b16 %v993, %v989
    %v1326 = vpack.c.b16 %v994, %v990
    %v1327 = vpack.c.b16 %v999, %v995
    %v1328 = vpack.c.b16 %v1000, %v996
    %v1329 = vpack.c.b16 %v1001, %v997
    %v1330 = vpack.c.b16 %v1002, %v998
    %v1331 = vpack.c.b16 %v1007, %v1003
    %v1332 = vpack.c.b16 %v1008, %v1004
    %v1333 = vpack.c.b16 %v1009, %v1005
    %v1334 = vpack.c.b16 %v1010, %v1006
    %v1335 = vpack.c.b16 %v1015, %v1011
    %v1336 = vpack.c.b16 %v1016, %v1012
    %v1337 = vpack.c.b16 %v1017, %v1013
    %v1338 = vpack.c.b16 %v1018, %v1014
    %v1339 = vpack.c.b16 %v1023, %v1019
    %v1340 = vpack.c.b16 %v1024, %v1020
    %v1341 = vpack.c.b16 %v1025, %v1021
    %v1342 = vpack.c.b16 %v1026, %v1022
    %v1343 = vpack.c.b16 %v1031, %v1027
    %v1344 = vpack.c.b16 %v1032, %v1028
    %v1345 = vpack.c.b16 %v1033, %v1029
    %v1346 = vpack.c.b16 %v1034, %v1030
    %v1347 = vpack.c.b16 %v1039, %v1035
    %v1348 = vpack.c.b16 %v1040, %v1036
    %v1349 = vpack.c.b16 %v1041, %v1037
    %v1350 = vpack.c.b16 %v1042, %v1038
    %v1351 = vpack.c.b16 %v1047, %v1043
    %v1352 = vpack.c.b16 %v1048, %v1044
    %v1353 = vpack.c.b16 %v1049, %v1045
    %v1354 = vpack.c.b16 %v1050, %v1046
    %v1355 = vpack.c.b16 %v1055, %v1051
    %v1356 = vpack.c.b16 %v1056, %v1052
    %v1357 = vpack.c.b16 %v1057, %v1053
    %v1358 = vpack.c.b16 %v1058, %v1054
    %v1359 = vpack.c.b16 %v1063, %v1059
    %v1360 = vpack.c.b16 %v1064, %v1060
    %v1361 = vpack.c.b16 %v1065, %v1061
    %v1362 = vpack.c.b16 %v1066, %v1062
    %v1363 = vpack.c.b16 %v1071, %v1067
    %v1364 = vpack.c.b16 %v1072, %v1068
    %v1365 = vpack.c.b16 %v1073, %v1069
    %v1366 = vpack.c.b16 %v1074, %v1070
    %v1367 = vpack.c.b16 %v1079, %v1075
    %v1368 = vpack.c.b16 %v1080, %v1076
    %v1369 = vpack.c.b16 %v1081, %v1077
    %v1370 = vpack.c.b16 %v1082, %v1078
    %v1371 = vpack.c.b16 %v1087, %v1083
    %v1372 = vpack.c.b16 %v1088, %v1084
    %v1373 = vpack.c.b16 %v1089, %v1085
    %v1374 = vpack.c.b16 %v1090, %v1086
    %v1375 = vpack.c.b16 %v1095, %v1091
    %v1376 = vpack.c.b16 %v1096, %v1092
    %v1377 = vpack.c.b16 %v1097, %v1093
    %v1378 = vpack.c.b16 %v1098, %v1094
    %v1379 = vpack.c.b16 %v1103, %v1099
    %v1380 = vpack.c.b16 %v1104, %v1100
    %v1381 = vpack.c.b16 %v1105, %v1101
    %v1382 = vpack.c.b16 %v1106, %v1102
    %v1383 = vpack.c.b16 %v1111, %v1107
    %v1384 = vpack.c.b16 %v1112, %v1108
    %v1385 = vpack.c.b16 %v1113, %v1109
    %v1386 = vpack.c.b16 %v1114, %v1110
    %v1387 = vpack.c.b16 %v1119, %v1115
    %v1388 = vpack.c.b16 %v1120, %v1116
    %v1389 = vpack.c.b16 %v1121, %v1117
    %v1390 = vpack.c.b16 %v1122, %v1118
    %v1391 = vpack.c.b16 %v1127, %v1123
    %v1392 = vpack.c.b16 %v1128, %v1124
    %v1393 = vpack.c.b16 %v1129, %v1125
    %v1394 = vpack.c.b16 %v1130, %v1126
    %v1395 = vpack.c.b16 %v1135, %v1131
    %v1396 = vpack.c.b16 %v1136, %v1132
    %v1397 = vpack.c.b16 %v1137, %v1133
    %v1398 = vpack.c.b16 %v1138, %v1134
    %v1399 = vpack.c.b16 %v1143, %v1139
    %v1400 = vpack.c.b16 %v1144, %v1140
    %v1401 = vpack.c.b16 %v1145, %v1141
    %v1402 = vpack.c.b16 %v1146, %v1142
    %1659 = vmatprep.subr.bf16.mxu0 %v1148
    %1660 = vmatpush1.bf16.msra.mxu0 %v1147
    %1661 = vmatprep.subr.bf16.mxu0 %v1152
    %1662 = vmatpush1.bf16.msra.mxu0 %v1151
    %1663 = vmatprep.subr.bf16.mxu0 %v1156
    %1664 = vmatpush1.bf16.msra.mxu0 %v1155
    %1665 = vmatprep.subr.bf16.mxu0 %v1160
    %1666 = vmatpush1.bf16.msra.mxu0 %v1159
    %1667 = vmatprep.subr.bf16.mxu0 %v1164
    %1668 = vmatpush1.bf16.msra.mxu0 %v1163
    %1669 = vmatprep.subr.bf16.mxu0 %v1168
    %1670 = vmatpush1.bf16.msra.mxu0 %v1167
    %1671 = vmatprep.subr.bf16.mxu0 %v1172
    %1672 = vmatpush1.bf16.msra.mxu0 %v1171
    %1673 = vmatprep.subr.bf16.mxu0 %v1176
    %1674 = vmatpush1.bf16.msra.mxu0 %v1175
    %1675 = vmatprep.subr.bf16.mxu0 %v1180
    %1676 = vmatpush1.bf16.msra.mxu0 %v1179
    %1677 = vmatprep.subr.bf16.mxu0 %v1184
    %1678 = vmatpush1.bf16.msra.mxu0 %v1183
    %1679 = vmatprep.subr.bf16.mxu0 %v1188
    %1680 = vmatpush1.bf16.msra.mxu0 %v1187
    %1681 = vmatprep.subr.bf16.mxu0 %v1192
    %1682 = vmatpush1.bf16.msra.mxu0 %v1191
    %1683 = vmatprep.subr.bf16.mxu0 %v1196
    %1684 = vmatpush1.bf16.msra.mxu0 %v1195
    %1685 = vmatprep.subr.bf16.mxu0 %v1200
    %1686 = vmatpush1.bf16.msra.mxu0 %v1199
    %1687 = vmatprep.subr.bf16.mxu0 %v1204
    %1688 = vmatpush1.bf16.msra.mxu0 %v1203
    %1689 = vmatprep.subr.bf16.mxu0 %v1208
    %1690 = vmatpush1.bf16.msra.mxu0 %v1207
    %1691 = vmatprep.mubr.bf16.mxu0 %v350
    %1692 = vmatmul.mubr.bf16.gmra.mrb[0].mxu0 %v349
    %v1693 = vpop.f32.mrb[0].mxu0
    %v1694 = vadd.f32 %v366, %v1693
    %v1695 = vpop.f32.mrb[0].mxu0
    %v1696 = vadd.f32 %v370, %v1695
    %v1697 = vpop.f32.mrb[0].mxu0
    %v1698 = vpop.f32.mrb[0].mxu0
    %1699 = vdwg.mxu0
    %1700 = vmatprep.subr.bf16.mxu0 %v1212
    %1701 = vmatpush1.bf16.msra.mxu0 %v1211
    %1702 = vmatprep.subr.bf16.mxu0 %v1216
    %1703 = vmatpush1.bf16.msra.mxu0 %v1215
    %1704 = vmatprep.subr.bf16.mxu0 %v1220
    %1705 = vmatpush1.bf16.msra.mxu0 %v1219
    %1706 = vmatprep.subr.bf16.mxu0 %v1224
    %1707 = vmatpush1.bf16.msra.mxu0 %v1223
    %1708 = vmatprep.subr.bf16.mxu0 %v1228
    %1709 = vmatpush1.bf16.msra.mxu0 %v1227
    %1710 = vmatprep.subr.bf16.mxu0 %v1232
    %1711 = vmatpush1.bf16.msra.mxu0 %v1231
    %1712 = vmatprep.subr.bf16.mxu0 %v1236
    %1713 = vmatpush1.bf16.msra.mxu0 %v1235
    %1714 = vmatprep.subr.bf16.mxu0 %v1240
    %1715 = vmatpush1.bf16.msra.mxu0 %v1239
    %1716 = vmatprep.subr.bf16.mxu0 %v1244
    %1717 = vmatpush1.bf16.msra.mxu0 %v1243
    %1718 = vmatprep.subr.bf16.mxu0 %v1248
    %1719 = vmatpush1.bf16.msra.mxu0 %v1247
    %1720 = vmatprep.subr.bf16.mxu0 %v1252
    %1721 = vmatpush1.bf16.msra.mxu0 %v1251
    %1722 = vmatprep.subr.bf16.mxu0 %v1256
    %1723 = vmatpush1.bf16.msra.mxu0 %v1255
    %1724 = vmatprep.subr.bf16.mxu0 %v1260
    %1725 = vmatpush1.bf16.msra.mxu0 %v1259
    %1726 = vmatprep.subr.bf16.mxu0 %v1264
    %1727 = vmatpush1.bf16.msra.mxu0 %v1263
    %1728 = vmatprep.subr.bf16.mxu0 %v1268
    %1729 = vmatpush1.bf16.msra.mxu0 %v1267
    %1730 = vmatprep.subr.bf16.mxu0 %v1272
    %1731 = vmatpush1.bf16.msra.mxu0 %v1271
    %1732 = vmatprep.mubr.bf16.mxu0 %v352
    %1733 = vmatmul.mubr.bf16.gmra.mrb[0].mxu0 %v351
    %v1734 = vpop.f32.mrb[0].mxu0
    %v1735 = vadd.f32 %v1694, %v1734
    %v1736 = vpop.f32.mrb[0].mxu0
    %v1737 = vadd.f32 %v1696, %v1736
    %v1738 = vpop.f32.mrb[0].mxu0
    %v1739 = vpop.f32.mrb[0].mxu0
    %1740 = vdwg.mxu0
    %1741 = vmatprep.subr.bf16.mxu0 %v1276
    %1742 = vmatpush1.bf16.msra.mxu0 %v1275
    %1743 = vmatprep.subr.bf16.mxu0 %v1280
    %1744 = vmatpush1.bf16.msra.mxu0 %v1279
    %1745 = vmatprep.subr.bf16.mxu0 %v1284
    %1746 = vmatpush1.bf16.msra.mxu0 %v1283
    %1747 = vmatprep.subr.bf16.mxu0 %v1288
    %1748 = vmatpush1.bf16.msra.mxu0 %v1287
    %1749 = vmatprep.subr.bf16.mxu0 %v1292
    %1750 = vmatpush1.bf16.msra.mxu0 %v1291
    %1751 = vmatprep.subr.bf16.mxu0 %v1296
    %1752 = vmatpush1.bf16.msra.mxu0 %v1295
    %1753 = vmatprep.subr.bf16.mxu0 %v1300
    %1754 = vmatpush1.bf16.msra.mxu0 %v1299
    %1755 = vmatprep.subr.bf16.mxu0 %v1304
    %1756 = vmatpush1.bf16.msra.mxu0 %v1303
    %1757 = vmatprep.subr.bf16.mxu0 %v1308
    %1758 = vmatpush1.bf16.msra.mxu0 %v1307
    %1759 = vmatprep.subr.bf16.mxu0 %v1312
    %1760 = vmatpush1.bf16.msra.mxu0 %v1311
    %1761 = vmatprep.subr.bf16.mxu0 %v1316
    %1762 = vmatpush1.bf16.msra.mxu0 %v1315
    %1763 = vmatprep.subr.bf16.mxu0 %v1320
    %1764 = vmatpush1.bf16.msra.mxu0 %v1319
    %1765 = vmatprep.subr.bf16.mxu0 %v1324
    %1766 = vmatpush1.bf16.msra.mxu0 %v1323
    %1767 = vmatprep.subr.bf16.mxu0 %v1328
    %1768 = vmatpush1.bf16.msra.mxu0 %v1327
    %1769 = vmatprep.subr.bf16.mxu0 %v1332
    %1770 = vmatpush1.bf16.msra.mxu0 %v1331
    %1771 = vmatprep.subr.bf16.mxu0 %v1336
    %1772 = vmatpush1.bf16.msra.mxu0 %v1335
    %1773 = vmatprep.mubr.bf16.mxu0 %v354
    %1774 = vmatmul.mubr.bf16.gmra.mrb[0].mxu0 %v353
    %v1775 = vpop.f32.mrb[0].mxu0
    %v1776 = vadd.f32 %v1735, %v1775
    %v1777 = vpop.f32.mrb[0].mxu0
    %v1778 = vadd.f32 %v1737, %v1777
    %v1779 = vpop.f32.mrb[0].mxu0
    %v1780 = vpop.f32.mrb[0].mxu0
    %1781 = vdwg.mxu0
    %1782 = vmatprep.subr.bf16.mxu0 %v1340
    %1783 = vmatpush1.bf16.msra.mxu0 %v1339
    %1784 = vmatprep.subr.bf16.mxu0 %v1344
    %1785 = vmatpush1.bf16.msra.mxu0 %v1343
    %1786 = vmatprep.subr.bf16.mxu0 %v1348
    %1787 = vmatpush1.bf16.msra.mxu0 %v1347
    %1788 = vmatprep.subr.bf16.mxu0 %v1352
    %1789 = vmatpush1.bf16.msra.mxu0 %v1351
    %1790 = vmatprep.subr.bf16.mxu0 %v1356
    %1791 = vmatpush1.bf16.msra.mxu0 %v1355
    %1792 = vmatprep.subr.bf16.mxu0 %v1360
    %1793 = vmatpush1.bf16.msra.mxu0 %v1359
    %1794 = vmatprep.subr.bf16.mxu0 %v1364
    %1795 = vmatpush1.bf16.msra.mxu0 %v1363
    %1796 = vmatprep.subr.bf16.mxu0 %v1368
    %1797 = vmatpush1.bf16.msra.mxu0 %v1367
    %1798 = vmatprep.subr.bf16.mxu0 %v1372
    %1799 = vmatpush1.bf16.msra.mxu0 %v1371
    %1800 = vmatprep.subr.bf16.mxu0 %v1376
    %1801 = vmatpush1.bf16.msra.mxu0 %v1375
    %1802 = vmatprep.subr.bf16.mxu0 %v1380
    %1803 = vmatpush1.bf16.msra.mxu0 %v1379
    %1804 = vmatprep.subr.bf16.mxu0 %v1384
    %1805 = vmatpush1.bf16.msra.mxu0 %v1383
    %1806 = vmatprep.subr.bf16.mxu0 %v1388
    %1807 = vmatpush1.bf16.msra.mxu0 %v1387
    %1808 = vmatprep.subr.bf16.mxu0 %v1392
    %1809 = vmatpush1.bf16.msra.mxu0 %v1391
    %1810 = vmatprep.subr.bf16.mxu0 %v1396
    %1811 = vmatpush1.bf16.msra.mxu0 %v1395
    %1812 = vmatprep.subr.bf16.mxu0 %v1400
    %1813 = vmatpush1.bf16.msra.mxu0 %v1399
    %1814 = vmatprep.mubr.bf16.mxu0 %v356
    %1815 = vmatmul.mubr.bf16.gmra.mrb[0].mxu0 %v355
    %v1816 = vpop.f32.mrb[0].mxu0
    %v1817 = vadd.f32 %v1776, %v1816
    %v1818 = vpop.f32.mrb[0].mxu0
    %v1819 = vadd.f32 %v1778, %v1818
    %v1820 = vpop.f32.mrb[0].mxu0
    %v1821 = vpop.f32.mrb[0].mxu0
    %1822 = vdwg.mxu0
    %1823 = vmatprep.subr.bf16.mxu0 %v1150
    %1824 = vmatpush1.bf16.msra.mxu0 %v1149
    %1825 = vmatprep.subr.bf16.mxu0 %v1154
    %1826 = vmatpush1.bf16.msra.mxu0 %v1153
    %1827 = vmatprep.subr.bf16.mxu0 %v1158
    %1828 = vmatpush1.bf16.msra.mxu0 %v1157
    %1829 = vmatprep.subr.bf16.mxu0 %v1162
    %1830 = vmatpush1.bf16.msra.mxu0 %v1161
    %1831 = vmatprep.subr.bf16.mxu0 %v1166
    %1832 = vmatpush1.bf16.msra.mxu0 %v1165
    %1833 = vmatprep.subr.bf16.mxu0 %v1170
    %1834 = vmatpush1.bf16.msra.mxu0 %v1169
    %1835 = vmatprep.subr.bf16.mxu0 %v1174
    %1836 = vmatpush1.bf16.msra.mxu0 %v1173
    %1837 = vmatprep.subr.bf16.mxu0 %v1178
    %1838 = vmatpush1.bf16.msra.mxu0 %v1177
    %1839 = vmatprep.subr.bf16.mxu0 %v1182
    %1840 = vmatpush1.bf16.msra.mxu0 %v1181
    %1841 = vmatprep.subr.bf16.mxu0 %v1186
    %1842 = vmatpush1.bf16.msra.mxu0 %v1185
    %1843 = vmatprep.subr.bf16.mxu0 %v1190
    %1844 = vmatpush1.bf16.msra.mxu0 %v1189
    %1845 = vmatprep.subr.bf16.mxu0 %v1194
    %1846 = vmatpush1.bf16.msra.mxu0 %v1193
    %1847 = vmatprep.subr.bf16.mxu0 %v1198
    %1848 = vmatpush1.bf16.msra.mxu0 %v1197
    %1849 = vmatprep.subr.bf16.mxu0 %v1202
    %1850 = vmatpush1.bf16.msra.mxu0 %v1201
    %1851 = vmatprep.subr.bf16.mxu0 %v1206
    %1852 = vmatpush1.bf16.msra.mxu0 %v1205
    %1853 = vmatprep.subr.bf16.mxu0 %v1210
    %1854 = vmatpush1.bf16.msra.mxu0 %v1209
    %1855 = vmatprep.mubr.bf16.mxu0 %v350
    %1856 = vmatmul.mubr.bf16.gmra.mrb[0].mxu0 %v349
    %v1857 = vpop.f32.mrb[0].mxu0
    %v1858 = vadd.f32 %v374, %v1857
    %v1859 = vpop.f32.mrb[0].mxu0
    %v1860 = vadd.f32 %v378, %v1859
    %v1861 = vpop.f32.mrb[0].mxu0
    %v1862 = vpop.f32.mrb[0].mxu0
    %1863 = vdwg.mxu0
    %1864 = vmatprep.subr.bf16.mxu0 %v1214
    %1865 = vmatpush1.bf16.msra.mxu0 %v1213
    %1866 = vmatprep.subr.bf16.mxu0 %v1218
    %1867 = vmatpush1.bf16.msra.mxu0 %v1217
    %1868 = vmatprep.subr.bf16.mxu0 %v1222
    %1869 = vmatpush1.bf16.msra.mxu0 %v1221
    %1870 = vmatprep.subr.bf16.mxu0 %v1226
    %1871 = vmatpush1.bf16.msra.mxu0 %v1225
    %1872 = vmatprep.subr.bf16.mxu0 %v1230
    %1873 = vmatpush1.bf16.msra.mxu0 %v1229
    %1874 = vmatprep.subr.bf16.mxu0 %v1234
    %1875 = vmatpush1.bf16.msra.mxu0 %v1233
    %1876 = vmatprep.subr.bf16.mxu0 %v1238
    %1877 = vmatpush1.bf16.msra.mxu0 %v1237
    %1878 = vmatprep.subr.bf16.mxu0 %v1242
    %1879 = vmatpush1.bf16.msra.mxu0 %v1241
    %1880 = vmatprep.subr.bf16.mxu0 %v1246
    %1881 = vmatpush1.bf16.msra.mxu0 %v1245
    %1882 = vmatprep.subr.bf16.mxu0 %v1250
    %1883 = vmatpush1.bf16.msra.mxu0 %v1249
    %1884 = vmatprep.subr.bf16.mxu0 %v1254
    %1885 = vmatpush1.bf16.msra.mxu0 %v1253
    %1886 = vmatprep.subr.bf16.mxu0 %v1258
    %1887 = vmatpush1.bf16.msra.mxu0 %v1257
    %1888 = vmatprep.subr.bf16.mxu0 %v1262
    %1889 = vmatpush1.bf16.msra.mxu0 %v1261
    %1890 = vmatprep.subr.bf16.mxu0 %v1266
    %1891 = vmatpush1.bf16.msra.mxu0 %v1265
    %1892 = vmatprep.subr.bf16.mxu0 %v1270
    %1893 = vmatpush1.bf16.msra.mxu0 %v1269
    %1894 = vmatprep.subr.bf16.mxu0 %v1274
    %1895 = vmatpush1.bf16.msra.mxu0 %v1273
    %1896 = vmatprep.mubr.bf16.mxu0 %v352
    %1897 = vmatmul.mubr.bf16.gmra.mrb[0].mxu0 %v351
    %v1898 = vpop.f32.mrb[0].mxu0
    %v1899 = vadd.f32 %v1858, %v1898
    %v1900 = vpop.f32.mrb[0].mxu0
    %v1901 = vadd.f32 %v1860, %v1900
    %v1902 = vpop.f32.mrb[0].mxu0
    %v1903 = vpop.f32.mrb[0].mxu0
    %1904 = vdwg.mxu0
    %1905 = vmatprep.subr.bf16.mxu0 %v1278
    %1906 = vmatpush1.bf16.msra.mxu0 %v1277
    %1907 = vmatprep.subr.bf16.mxu0 %v1282
    %1908 = vmatpush1.bf16.msra.mxu0 %v1281
    %1909 = vmatprep.subr.bf16.mxu0 %v1286
    %1910 = vmatpush1.bf16.msra.mxu0 %v1285
    %1911 = vmatprep.subr.bf16.mxu0 %v1290
    %1912 = vmatpush1.bf16.msra.mxu0 %v1289
    %1913 = vmatprep.subr.bf16.mxu0 %v1294
    %1914 = vmatpush1.bf16.msra.mxu0 %v1293
    %1915 = vmatprep.subr.bf16.mxu0 %v1298
    %1916 = vmatpush1.bf16.msra.mxu0 %v1297
    %1917 = vmatprep.subr.bf16.mxu0 %v1302
    %1918 = vmatpush1.bf16.msra.mxu0 %v1301
    %1919 = vmatprep.subr.bf16.mxu0 %v1306
    %1920 = vmatpush1.bf16.msra.mxu0 %v1305
    %1921 = vmatprep.subr.bf16.mxu0 %v1310
    %1922 = vmatpush1.bf16.msra.mxu0 %v1309
    %1923 = vmatprep.subr.bf16.mxu0 %v1314
    %1924 = vmatpush1.bf16.msra.mxu0 %v1313
    %1925 = vmatprep.subr.bf16.mxu0 %v1318
    %1926 = vmatpush1.bf16.msra.mxu0 %v1317
    %1927 = vmatprep.subr.bf16.mxu0 %v1322
    %1928 = vmatpush1.bf16.msra.mxu0 %v1321
    %1929 = vmatprep.subr.bf16.mxu0 %v1326
    %1930 = vmatpush1.bf16.msra.mxu0 %v1325
    %1931 = vmatprep.subr.bf16.mxu0 %v1330
    %1932 = vmatpush1.bf16.msra.mxu0 %v1329
    %1933 = vmatprep.subr.bf16.mxu0 %v1334
    %1934 = vmatpush1.bf16.msra.mxu0 %v1333
    %1935 = vmatprep.subr.bf16.mxu0 %v1338
    %1936 = vmatpush1.bf16.msra.mxu0 %v1337
    %1937 = vmatprep.mubr.bf16.mxu0 %v354
    %1938 = vmatmul.mubr.bf16.gmra.mrb[0].mxu0 %v353
    %v1939 = vpop.f32.mrb[0].mxu0
    %v1940 = vadd.f32 %v1899, %v1939
    %v1941 = vpop.f32.mrb[0].mxu0
    %v1942 = vadd.f32 %v1901, %v1941
    %v1943 = vpop.f32.mrb[0].mxu0
    %v1944 = vpop.f32.mrb[0].mxu0
    %1945 = vdwg.mxu0
    %1946 = vmatprep.subr.bf16.mxu0 %v1342
    %1947 = vmatpush1.bf16.msra.mxu0 %v1341
    %1948 = vmatprep.subr.bf16.mxu0 %v1346
    %1949 = vmatpush1.bf16.msra.mxu0 %v1345
    %1950 = vmatprep.subr.bf16.mxu0 %v1350
    %1951 = vmatpush1.bf16.msra.mxu0 %v1349
    %1952 = vmatprep.subr.bf16.mxu0 %v1354
    %1953 = vmatpush1.bf16.msra.mxu0 %v1353
    %1954 = vmatprep.subr.bf16.mxu0 %v1358
    %1955 = vmatpush1.bf16.msra.mxu0 %v1357
    %1956 = vmatprep.subr.bf16.mxu0 %v1362
    %1957 = vmatpush1.bf16.msra.mxu0 %v1361
    %1958 = vmatprep.subr.bf16.mxu0 %v1366
    %1959 = vmatpush1.bf16.msra.mxu0 %v1365
    %1960 = vmatprep.subr.bf16.mxu0 %v1370
    %1961 = vmatpush1.bf16.msra.mxu0 %v1369
    %1962 = vmatprep.subr.bf16.mxu0 %v1374
    %1963 = vmatpush1.bf16.msra.mxu0 %v1373
    %1964 = vmatprep.subr.bf16.mxu0 %v1378
    %1965 = vmatpush1.bf16.msra.mxu0 %v1377
    %1966 = vmatprep.subr.bf16.mxu0 %v1382
    %1967 = vmatpush1.bf16.msra.mxu0 %v1381
    %1968 = vmatprep.subr.bf16.mxu0 %v1386
    %1969 = vmatpush1.bf16.msra.mxu0 %v1385
    %1970 = vmatprep.subr.bf16.mxu0 %v1390
    %1971 = vmatpush1.bf16.msra.mxu0 %v1389
    %1972 = vmatprep.subr.bf16.mxu0 %v1394
    %1973 = vmatpush1.bf16.msra.mxu0 %v1393
    %1974 = vmatprep.subr.bf16.mxu0 %v1398
    %1975 = vmatpush1.bf16.msra.mxu0 %v1397
    %1976 = vmatprep.subr.bf16.mxu0 %v1402
    %1977 = vmatpush1.bf16.msra.mxu0 %v1401
    %1978 = vmatprep.mubr.bf16.mxu0 %v356
    %1979 = vmatmul.mubr.bf16.gmra.mrb[0].mxu0 %v355
    %v1980 = vpop.f32.mrb[0].mxu0
    %v1981 = vadd.f32 %v1940, %v1980
    %v1982 = vpop.f32.mrb[0].mxu0
    %v1983 = vadd.f32 %v1942, %v1982
    %v1984 = vpop.f32.mrb[0].mxu0
    %v1985 = vpop.f32.mrb[0].mxu0
    %1986 = vdwg.mxu0
    %v1987 = vmax.f32 %v1817, 0.0
    %v1988 = vmax.f32 %v1819, 0.0
    %v1989 = vmax.f32 %v1981, 0.0
    %v1990 = vmax.f32 %v1983, 0.0
    %v1991 = vld [vmem:[#allocation4] sm:$0xf]
    %v1992 = vld [vmem:[#allocation4 + $0x4] sm:$0xf]
    %v1993 = vld [vmem:[#allocation4 + $0x8] sm:$0xf]
    %v1994 = vld [vmem:[#allocation4 + $0xc] sm:$0xf]
    %v1995 = vld [vmem:[#allocation4 + $0x10] sm:$0xf]
    %v1996 = vld [vmem:[#allocation4 + $0x14] sm:$0xf]
    %v1997 = vld [vmem:[#allocation4 + $0x18] sm:$0xf]
    %v1998 = vld [vmem:[#allocation4 + $0x1c] sm:$0xf]
    %v1999 = vld [vmem:[#allocation4 + $0x20] sm:$0xf]
    %v2000 = vld [vmem:[#allocation4 + $0x24] sm:$0xf]
    %v2001 = vld [vmem:[#allocation4 + $0x28] sm:$0xf]
    %v2002 = vld [vmem:[#allocation4 + $0x2c] sm:$0xf]
    %v2003 = vld [vmem:[#allocation4 + $0x30] sm:$0xf]
    %v2004 = vld [vmem:[#allocation4 + $0x34] sm:$0xf]
    %v2005 = vld [vmem:[#allocation4 + $0x38] sm:$0xf]
    %v2006 = vld [vmem:[#allocation4 + $0x3c] sm:$0xf]
    %v2007 = vld [vmem:[#allocation4 + $0x40] sm:$0xf]
    %v2008 = vld [vmem:[#allocation4 + $0x44] sm:$0xf]
    %v2009 = vld [vmem:[#allocation4 + $0x48] sm:$0xf]
    %v2010 = vld [vmem:[#allocation4 + $0x4c] sm:$0xf]
    %v2011 = vld [vmem:[#allocation4 + $0x50] sm:$0xf]
    %v2012 = vld [vmem:[#allocation4 + $0x54] sm:$0xf]
    %v2013 = vld [vmem:[#allocation4 + $0x58] sm:$0xf]
    %v2014 = vld [vmem:[#allocation4 + $0x5c] sm:$0xf]
    %v2015 = vld [vmem:[#allocation4 + $0x60] sm:$0xf]
    %v2016 = vld [vmem:[#allocation4 + $0x64] sm:$0xf]
    %v2017 = vld [vmem:[#allocation4 + $0x68] sm:$0xf]
    %v2018 = vld [vmem:[#allocation4 + $0x6c] sm:$0xf]
    %v2019 = vld [vmem:[#allocation4 + $0x70] sm:$0xf]
    %v2020 = vld [vmem:[#allocation4 + $0x74] sm:$0xf]
    %v2021 = vld [vmem:[#allocation4 + $0x78] sm:$0xf]
    %v2022 = vld [vmem:[#allocation4 + $0x7c] sm:$0xf]
    %v2023 = vld [vmem:[#allocation4 + $0x80] sm:$0xf]
    %v2024 = vld [vmem:[#allocation4 + $0x84] sm:$0xf]
    %v2025 = vld [vmem:[#allocation4 + $0x88] sm:$0xf]
    %v2026 = vld [vmem:[#allocation4 + $0x8c] sm:$0xf]
    %v2027 = vld [vmem:[#allocation4 + $0x90] sm:$0xf]
    %v2028 = vld [vmem:[#allocation4 + $0x94] sm:$0xf]
    %v2029 = vld [vmem:[#allocation4 + $0x98] sm:$0xf]
    %v2030 = vld [vmem:[#allocation4 + $0x9c] sm:$0xf]
    %v2031 = vld [vmem:[#allocation4 + $0xa0] sm:$0xf]
    %v2032 = vld [vmem:[#allocation4 + $0xa4] sm:$0xf]
    %v2033 = vld [vmem:[#allocation4 + $0xa8] sm:$0xf]
    %v2034 = vld [vmem:[#allocation4 + $0xac] sm:$0xf]
    %v2035 = vld [vmem:[#allocation4 + $0xb0] sm:$0xf]
    %v2036 = vld [vmem:[#allocation4 + $0xb4] sm:$0xf]
    %v2037 = vld [vmem:[#allocation4 + $0xb8] sm:$0xf]
    %v2038 = vld [vmem:[#allocation4 + $0xbc] sm:$0xf]
    %v2039 = vld [vmem:[#allocation4 + $0xc0] sm:$0xf]
    %v2040 = vld [vmem:[#allocation4 + $0xc4] sm:$0xf]
    %v2041 = vld [vmem:[#allocation4 + $0xc8] sm:$0xf]
    %v2042 = vld [vmem:[#allocation4 + $0xcc] sm:$0xf]
    %v2043 = vld [vmem:[#allocation4 + $0xd0] sm:$0xf]
    %v2044 = vld [vmem:[#allocation4 + $0xd4] sm:$0xf]
    %v2045 = vld [vmem:[#allocation4 + $0xd8] sm:$0xf]
    %v2046 = vld [vmem:[#allocation4 + $0xdc] sm:$0xf]
    %v2047 = vld [vmem:[#allocation4 + $0xe0] sm:$0xf]
    %v2048 = vld [vmem:[#allocation4 + $0xe4] sm:$0xf]
    %v2049 = vld [vmem:[#allocation4 + $0xe8] sm:$0xf]
    %v2050 = vld [vmem:[#allocation4 + $0xec] sm:$0xf]
    %v2051 = vld [vmem:[#allocation4 + $0xf0] sm:$0xf]
    %v2052 = vld [vmem:[#allocation4 + $0xf4] sm:$0xf]
    %v2053 = vld [vmem:[#allocation4 + $0xf8] sm:$0xf]
    %v2054 = vld [vmem:[#allocation4 + $0xfc] sm:$0xf]
    %v2055 = vpack.c.bf16 %v1987, %v1987
    %v2056 = vpack.c.bf16 %v1988, %v1988
    %v2057 = vpack.c.bf16 %v1989, %v1989
    %v2058 = vpack.c.bf16 %v1990, %v1990
    %v2059 = vld [vmem:[#allocation4 + $0x100] sm:$0x1]
    %v2060 = vunpack.c.l.bf16 %v2059
    %v2061 = vlaneseq
    %v2062 = vshrl.u32 %v2061, 7
    %v2063 = vsub.s32 0, %v2062
    %v2064 = vrot.slane %v2060, %v2063
    %v2129 = vunpack.c.l.b16 %v1991
    %v2130 = vunpack.c.l.b16 %v1992
    %v2131 = vunpack.c.l.b16 %v1993
    %v2132 = vunpack.c.l.b16 %v1994
    %v2133 = vunpack.c.l.b16 %v1995
    %v2134 = vunpack.c.l.b16 %v1996
    %v2135 = vunpack.c.l.b16 %v1997
    %v2136 = vunpack.c.l.b16 %v1998
    %v2137 = vunpack.c.l.b16 %v1999
    %v2138 = vunpack.c.l.b16 %v2000
    %v2139 = vunpack.c.l.b16 %v2001
    %v2140 = vunpack.c.l.b16 %v2002
    %v2141 = vunpack.c.l.b16 %v2003
    %v2142 = vunpack.c.l.b16 %v2004
    %v2143 = vunpack.c.l.b16 %v2005
    %v2144 = vunpack.c.l.b16 %v2006
    %v2145 = vunpack.c.l.b16 %v2007
    %v2146 = vunpack.c.l.b16 %v2008
    %v2147 = vunpack.c.l.b16 %v2009
    %v2148 = vunpack.c.l.b16 %v2010
    %v2149 = vunpack.c.l.b16 %v2011
    %v2150 = vunpack.c.l.b16 %v2012
    %v2151 = vunpack.c.l.b16 %v2013
    %v2152 = vunpack.c.l.b16 %v2014
    %v2153 = vunpack.c.l.b16 %v2015
    %v2154 = vunpack.c.l.b16 %v2016
    %v2155 = vunpack.c.l.b16 %v2017
    %v2156 = vunpack.c.l.b16 %v2018
    %v2157 = vunpack.c.l.b16 %v2019
    %v2158 = vunpack.c.l.b16 %v2020
    %v2159 = vunpack.c.l.b16 %v2021
    %v2160 = vunpack.c.l.b16 %v2022
    %v2161 = vunpack.c.l.b16 %v2023
    %v2162 = vunpack.c.l.b16 %v2024
    %v2163 = vunpack.c.l.b16 %v2025
    %v2164 = vunpack.c.l.b16 %v2026
    %v2165 = vunpack.c.l.b16 %v2027
    %v2166 = vunpack.c.l.b16 %v2028
    %v2167 = vunpack.c.l.b16 %v2029
    %v2168 = vunpack.c.l.b16 %v2030
    %v2169 = vunpack.c.l.b16 %v2031
    %v2170 = vunpack.c.l.b16 %v2032
    %v2171 = vunpack.c.l.b16 %v2033
    %v2172 = vunpack.c.l.b16 %v2034
    %v2173 = vunpack.c.l.b16 %v2035
    %v2174 = vunpack.c.l.b16 %v2036
    %v2175 = vunpack.c.l.b16 %v2037
    %v2176 = vunpack.c.l.b16 %v2038
    %v2177 = vunpack.c.l.b16 %v2039
    %v2178 = vunpack.c.l.b16 %v2040
    %v2179 = vunpack.c.l.b16 %v2041
    %v2180 = vunpack.c.l.b16 %v2042
    %v2181 = vunpack.c.l.b16 %v2043
    %v2182 = vunpack.c.l.b16 %v2044
    %v2183 = vunpack.c.l.b16 %v2045
    %v2184 = vunpack.c.l.b16 %v2046
    %v2185 = vunpack.c.l.b16 %v2047
    %v2186 = vunpack.c.l.b16 %v2048
    %v2187 = vunpack.c.l.b16 %v2049
    %v2188 = vunpack.c.l.b16 %v2050
    %v2189 = vunpack.c.l.b16 %v2051
    %v2190 = vunpack.c.l.b16 %v2052
    %v2191 = vunpack.c.l.b16 %v2053
    %v2192 = vunpack.c.l.b16 %v2054
    %v2193 = vpack.c.b16 %v2130, %v2129
    %v2194 = vpack.c.b16 %v2132, %v2131
    %v2195 = vpack.c.b16 %v2134, %v2133
    %v2196 = vpack.c.b16 %v2136, %v2135
    %v2197 = vpack.c.b16 %v2138, %v2137
    %v2198 = vpack.c.b16 %v2140, %v2139
    %v2199 = vpack.c.b16 %v2142, %v2141
    %v2200 = vpack.c.b16 %v2144, %v2143
    %v2201 = vpack.c.b16 %v2146, %v2145
    %v2202 = vpack.c.b16 %v2148, %v2147
    %v2203 = vpack.c.b16 %v2150, %v2149
    %v2204 = vpack.c.b16 %v2152, %v2151
    %v2205 = vpack.c.b16 %v2154, %v2153
    %v2206 = vpack.c.b16 %v2156, %v2155
    %v2207 = vpack.c.b16 %v2158, %v2157
    %v2208 = vpack.c.b16 %v2160, %v2159
    %v2209 = vpack.c.b16 %v2162, %v2161
    %v2210 = vpack.c.b16 %v2164, %v2163
    %v2211 = vpack.c.b16 %v2166, %v2165
    %v2212 = vpack.c.b16 %v2168, %v2167
    %v2213 = vpack.c.b16 %v2170, %v2169
    %v2214 = vpack.c.b16 %v2172, %v2171
    %v2215 = vpack.c.b16 %v2174, %v2173
    %v2216 = vpack.c.b16 %v2176, %v2175
    %v2217 = vpack.c.b16 %v2178, %v2177
    %v2218 = vpack.c.b16 %v2180, %v2179
    %v2219 = vpack.c.b16 %v2182, %v2181
    %v2220 = vpack.c.b16 %v2184, %v2183
    %v2221 = vpack.c.b16 %v2186, %v2185
    %v2222 = vpack.c.b16 %v2188, %v2187
    %v2223 = vpack.c.b16 %v2190, %v2189
    %v2224 = vpack.c.b16 %v2192, %v2191
    %2257 = vmatprep.subr.bf16.mxu0 0
    %2258 = vmatpush1.bf16.msra.mxu0 %v2193
    %2259 = vmatprep.subr.bf16.mxu0 0
    %2260 = vmatpush1.bf16.msra.mxu0 %v2194
    %2261 = vmatprep.subr.bf16.mxu0 0
    %2262 = vmatpush1.bf16.msra.mxu0 %v2195
    %2263 = vmatprep.subr.bf16.mxu0 0
    %2264 = vmatpush1.bf16.msra.mxu0 %v2196
    %2265 = vmatprep.subr.bf16.mxu0 0
    %2266 = vmatpush1.bf16.msra.mxu0 %v2197
    %2267 = vmatprep.subr.bf16.mxu0 0
    %2268 = vmatpush1.bf16.msra.mxu0 %v2198
    %2269 = vmatprep.subr.bf16.mxu0 0
    %2270 = vmatpush1.bf16.msra.mxu0 %v2199
    %2271 = vmatprep.subr.bf16.mxu0 0
    %2272 = vmatpush1.bf16.msra.mxu0 %v2200
    %2273 = vmatprep.subr.bf16.mxu0 0
    %2274 = vmatpush1.bf16.msra.mxu0 %v2201
    %2275 = vmatprep.subr.bf16.mxu0 0
    %2276 = vmatpush1.bf16.msra.mxu0 %v2202
    %2277 = vmatprep.subr.bf16.mxu0 0
    %2278 = vmatpush1.bf16.msra.mxu0 %v2203
    %2279 = vmatprep.subr.bf16.mxu0 0
    %2280 = vmatpush1.bf16.msra.mxu0 %v2204
    %2281 = vmatprep.subr.bf16.mxu0 0
    %2282 = vmatpush1.bf16.msra.mxu0 %v2205
    %2283 = vmatprep.subr.bf16.mxu0 0
    %2284 = vmatpush1.bf16.msra.mxu0 %v2206
    %2285 = vmatprep.subr.bf16.mxu0 0
    %2286 = vmatpush1.bf16.msra.mxu0 %v2207
    %2287 = vmatprep.subr.bf16.mxu0 0
    %2288 = vmatpush1.bf16.msra.mxu0 %v2208
    %2289 = vmatprep.mubr.bf16.mxu0 %v2056
    %2290 = vmatmul.mubr.bf16.gmra.mrb[0].mxu0 %v2055
    %v2291 = vpop.f32.mrb[0].mxu0
    %v2292 = vadd.f32 %v2064, %v2291
    %v2293 = vpop.f32.mrb[0].mxu0
    %v2294 = vpop.f32.mrb[0].mxu0
    %v2295 = vpop.f32.mrb[0].mxu0
    %2296 = vdwg.mxu0
    %2297 = vmatprep.subr.bf16.mxu0 0
    %2298 = vmatpush1.bf16.msra.mxu0 %v2209
    %2299 = vmatprep.subr.bf16.mxu0 0
    %2300 = vmatpush1.bf16.msra.mxu0 %v2210
    %2301 = vmatprep.subr.bf16.mxu0 0
    %2302 = vmatpush1.bf16.msra.mxu0 %v2211
    %2303 = vmatprep.subr.bf16.mxu0 0
    %2304 = vmatpush1.bf16.msra.mxu0 %v2212
    %2305 = vmatprep.subr.bf16.mxu0 0
    %2306 = vmatpush1.bf16.msra.mxu0 %v2213
    %2307 = vmatprep.subr.bf16.mxu0 0
    %2308 = vmatpush1.bf16.msra.mxu0 %v2214
    %2309 = vmatprep.subr.bf16.mxu0 0
    %2310 = vmatpush1.bf16.msra.mxu0 %v2215
    %2311 = vmatprep.subr.bf16.mxu0 0
    %2312 = vmatpush1.bf16.msra.mxu0 %v2216
    %2313 = vmatprep.subr.bf16.mxu0 0
    %2314 = vmatpush1.bf16.msra.mxu0 %v2217
    %2315 = vmatprep.subr.bf16.mxu0 0
    %2316 = vmatpush1.bf16.msra.mxu0 %v2218
    %2317 = vmatprep.subr.bf16.mxu0 0
    %2318 = vmatpush1.bf16.msra.mxu0 %v2219
    %2319 = vmatprep.subr.bf16.mxu0 0
    %2320 = vmatpush1.bf16.msra.mxu0 %v2220
    %2321 = vmatprep.subr.bf16.mxu0 0
    %2322 = vmatpush1.bf16.msra.mxu0 %v2221
    %2323 = vmatprep.subr.bf16.mxu0 0
    %2324 = vmatpush1.bf16.msra.mxu0 %v2222
    %2325 = vmatprep.subr.bf16.mxu0 0
    %2326 = vmatpush1.bf16.msra.mxu0 %v2223
    %2327 = vmatprep.subr.bf16.mxu0 0
    %2328 = vmatpush1.bf16.msra.mxu0 %v2224
    %2329 = vmatprep.mubr.bf16.mxu0 %v2058
    %2330 = vmatmul.mubr.bf16.gmra.mrb[0].mxu0 %v2057
    %v2331 = vpop.f32.mrb[0].mxu0
    %v2332 = vadd.f32 %v2292, %v2331
    %v2333 = vpop.f32.mrb[0].mxu0
    %v2334 = vpop.f32.mrb[0].mxu0
    %v2335 = vpop.f32.mrb[0].mxu0
    %2336 = vdwg.mxu0
    %v2337 = vmax.f32 %v2332, 0.0
    %v2338 = vld [vmem:[#allocation4 + $0x104] sm:$0xf]
    %v2339 = vld [vmem:[#allocation4 + $0x108] sm:$0xf]
    %v2340 = vld [vmem:[#allocation4 + $0x10c] sm:$0xf]
    %v2341 = vld [vmem:[#allocation4 + $0x110] sm:$0xf]
    %v2342 = vld [vmem:[#allocation4 + $0x114] sm:$0xf]
    %v2343 = vld [vmem:[#allocation4 + $0x118] sm:$0xf]
    %v2344 = vld [vmem:[#allocation4 + $0x11c] sm:$0xf]
    %v2345 = vld [vmem:[#allocation4 + $0x120] sm:$0xf]
    %v2346 = vld [vmem:[#allocation4 + $0x124] sm:$0xf]
    %v2347 = vld [vmem:[#allocation4 + $0x128] sm:$0xf]
    %v2348 = vld [vmem:[#allocation4 + $0x12c] sm:$0xf]
    %v2349 = vld [vmem:[#allocation4 + $0x130] sm:$0xf]
    %v2350 = vld [vmem:[#allocation4 + $0x134] sm:$0xf]
    %v2351 = vld [vmem:[#allocation4 + $0x138] sm:$0xf]
    %v2352 = vld [vmem:[#allocation4 + $0x13c] sm:$0xf]
    %v2353 = vld [vmem:[#allocation4 + $0x140] sm:$0xf]
    %v2354 = vpack.c.bf16 %v2337, %v2337
    %v2355 = vld [vmem:[#allocation4 + $0x144] sm:$0x1]
    %v2356 = vunpack.c.l.bf16 %v2355
    %v2357 = vlaneseq
    %v2358 = vshrl.u32 %v2357, 7
    %v2359 = vsub.s32 0, %v2358
    %v2360 = vrot.slane %v2356, %v2359
    %v2377 = vunpack.c.l.b16 %v2338
    %v2378 = vunpack.c.l.b16 %v2339
    %v2379 = vunpack.c.l.b16 %v2340
    %v2380 = vunpack.c.l.b16 %v2341
    %v2381 = vunpack.c.l.b16 %v2342
    %v2382 = vunpack.c.l.b16 %v2343
    %v2383 = vunpack.c.l.b16 %v2344
    %v2384 = vunpack.c.l.b16 %v2345
    %v2385 = vunpack.c.l.b16 %v2346
    %v2386 = vunpack.c.l.b16 %v2347
    %v2387 = vunpack.c.l.b16 %v2348
    %v2388 = vunpack.c.l.b16 %v2349
    %v2389 = vunpack.c.l.b16 %v2350
    %v2390 = vunpack.c.l.b16 %v2351
    %v2391 = vunpack.c.l.b16 %v2352
    %v2392 = vunpack.c.l.b16 %v2353
    %v2393 = vpack.c.b16 %v2378, %v2377
    %v2394 = vpack.c.b16 %v2380, %v2379
    %v2395 = vpack.c.b16 %v2382, %v2381
    %v2396 = vpack.c.b16 %v2384, %v2383
    %v2397 = vpack.c.b16 %v2386, %v2385
    %v2398 = vpack.c.b16 %v2388, %v2387
    %v2399 = vpack.c.b16 %v2390, %v2389
    %v2400 = vpack.c.b16 %v2392, %v2391
    %2409 = vmatprep.subr.bf16.mxu0 0
    %2410 = vmatpush1.bf16.msra.mxu0 %v2393
    %2411 = vmatprep.subr.bf16.mxu0 0
    %2412 = vmatpush1.bf16.msra.mxu0 %v2394
    %2413 = vmatprep.subr.bf16.mxu0 0
    %2414 = vmatpush1.bf16.msra.mxu0 %v2395
    %2415 = vmatprep.subr.bf16.mxu0 0
    %2416 = vmatpush1.bf16.msra.mxu0 %v2396
    %2417 = vmatprep.subr.bf16.mxu0 0
    %2418 = vmatpush1.bf16.msra.mxu0 %v2397
    %2419 = vmatprep.subr.bf16.mxu0 0
    %2420 = vmatpush1.bf16.msra.mxu0 %v2398
    %2421 = vmatprep.subr.bf16.mxu0 0
    %2422 = vmatpush1.bf16.msra.mxu0 %v2399
    %2423 = vmatprep.subr.bf16.mxu0 0
    %2424 = vmatpush1.bf16.msra.mxu0 %v2400
    %2425 = vmatprep.subr.bf16.mxu0 0
    %2426 = vmatpush1.bf16.msra.mxu0 0
    %2427 = vmatprep.subr.bf16.mxu0 0
    %2428 = vmatpush1.bf16.msra.mxu0 0
    %2429 = vmatprep.subr.bf16.mxu0 0
    %2430 = vmatpush1.bf16.msra.mxu0 0
    %2431 = vmatprep.subr.bf16.mxu0 0
    %2432 = vmatpush1.bf16.msra.mxu0 0
    %2433 = vmatprep.subr.bf16.mxu0 0
    %2434 = vmatpush1.bf16.msra.mxu0 0
    %2435 = vmatprep.subr.bf16.mxu0 0
    %2436 = vmatpush1.bf16.msra.mxu0 0
    %2437 = vmatprep.subr.bf16.mxu0 0
    %2438 = vmatpush1.bf16.msra.mxu0 0
    %2439 = vmatprep.subr.bf16.mxu0 0
    %2440 = vmatpush1.bf16.msra.mxu0 0
    %2441 = vmatprep.mubr.bf16.mxu0 0
    %2442 = vmatmul.mubr.bf16.gmra.mrb[0].mxu0 %v2354
    %v2443 = vpop.f32.mrb[0].mxu0
    %v2444 = vadd.f32 %v2360, %v2443
    %v2445 = vpop.f32.mrb[0].mxu0
    %v2446 = vpop.f32.mrb[0].mxu0
    %v2447 = vpop.f32.mrb[0].mxu0
    %2448 = vdwg.mxu0
    %v2449 = vmax.f32 %v2444, 0.0
    %v2450 = vld [vmem:[#allocation4 + $0x148] sm:$0xf]
    %v2451 = vld [vmem:[#allocation4 + $0x14c] sm:$0xf]
    %v2452 = vld [vmem:[#allocation4 + $0x150] sm:$0xf]
    %v2453 = vld [vmem:[#allocation4 + $0x154] sm:$0xf]
    %v2454 = vld [vmem:[#allocation4 + $0x158] sm:$0xf]
    %v2455 = vld [vmem:[#allocation4 + $0x15c] sm:$0xf]
    %v2456 = vld [vmem:[#allocation4 + $0x160] sm:$0xf]
    %v2457 = vld [vmem:[#allocation4 + $0x164] sm:$0xf]
    %v2458 = vld [vmem:[#allocation4 + $0x168] sm:$0xf]
    %v2459 = vld [vmem:[#allocation4 + $0x16c] sm:$0xf]
    %v2460 = vld [vmem:[#allocation4 + $0x170] sm:$0xf]
    %v2461 = vld [vmem:[#allocation4 + $0x174] sm:$0xf]
    %v2462 = vld [vmem:[#allocation4 + $0x178] sm:$0xf]
    %v2463 = vld [vmem:[#allocation4 + $0x17c] sm:$0xf]
    %v2464 = vld [vmem:[#allocation4 + $0x180] sm:$0xf]
    %v2465 = vld [vmem:[#allocation4 + $0x184] sm:$0xf]
    %v2466 = vpack.c.bf16 %v2449, %v2449
    %v2467 = vld [vmem:[#allocation4 + $0x188] sm:$0xf]
    %v2468 = vpack.c.bf16 %v48, %v48
    %vm2469 = vcmask 64512
    %v2471 = vsel %vm2469, %v2468, 0
    %vm2473 = vcmask 1043456
    %v2475 = vsel %vm2473, %v2467, 0
    %2477 = vmatprep.subr.bf16.mxu0 0
    %2478 = vmatpush1.bf16.msra.mxu0 %v2475
    %2479 = vmatprep.subr.bf16.mxu0 0
    %2480 = vmatpush1.bf16.msra.mxu0 0
    %2481 = vmatprep.subr.bf16.mxu0 0
    %2482 = vmatpush1.bf16.msra.mxu0 0
    %2483 = vmatprep.subr.bf16.mxu0 0
    %2484 = vmatpush1.bf16.msra.mxu0 0
    %2485 = vmatprep.subr.bf16.mxu0 0
    %2486 = vmatpush1.bf16.msra.mxu0 0
    %2487 = vmatprep.subr.bf16.mxu0 0
    %2488 = vmatpush1.bf16.msra.mxu0 0
    %2489 = vmatprep.subr.bf16.mxu0 0
    %2490 = vmatpush1.bf16.msra.mxu0 0
    %2491 = vmatprep.subr.bf16.mxu0 0
    %2492 = vmatpush1.bf16.msra.mxu0 0
    %2493 = vmatprep.subr.bf16.mxu0 0
    %2494 = vmatpush1.bf16.msra.mxu0 0
    %2495 = vmatprep.subr.bf16.mxu0 0
    %2496 = vmatpush1.bf16.msra.mxu0 0
    %2497 = vmatprep.subr.bf16.mxu0 0
    %2498 = vmatpush1.bf16.msra.mxu0 0
    %2499 = vmatprep.subr.bf16.mxu0 0
    %2500 = vmatpush1.bf16.msra.mxu0 0
    %2501 = vmatprep.subr.bf16.mxu0 0
    %2502 = vmatpush1.bf16.msra.mxu0 0
    %2503 = vmatprep.subr.bf16.mxu0 0
    %2504 = vmatpush1.bf16.msra.mxu0 0
    %2505 = vmatprep.subr.bf16.mxu0 0
    %2506 = vmatpush1.bf16.msra.mxu0 0
    %2507 = vmatprep.subr.bf16.mxu0 0
    %2508 = vmatpush1.bf16.msra.mxu0 0
    %2509 = vmatprep.mubr.bf16.mxu0 0
    %2510 = vmatmul.mubr.bf16.gmra.mrb[0].mxu0 %v2471
    %v2511 = vpop.f32.mrb[0].mxu0
    %v2512 = vadd.f32 0.0, %v2511
    %v2513 = vpop.f32.mrb[0].mxu0
    %v2514 = vpop.f32.mrb[0].mxu0
    %v2515 = vpop.f32.mrb[0].mxu0
    %2516 = vdwg.mxu0
    %v2533 = vunpack.c.l.b16 %v2450
    %v2534 = vunpack.c.l.b16 %v2451
    %v2535 = vunpack.c.l.b16 %v2452
    %v2536 = vunpack.c.l.b16 %v2453
    %v2537 = vunpack.c.l.b16 %v2454
    %v2538 = vunpack.c.l.b16 %v2455
    %v2539 = vunpack.c.l.b16 %v2456
    %v2540 = vunpack.c.l.b16 %v2457
    %v2541 = vunpack.c.l.b16 %v2458
    %v2542 = vunpack.c.l.b16 %v2459
    %v2543 = vunpack.c.l.b16 %v2460
    %v2544 = vunpack.c.l.b16 %v2461
    %v2545 = vunpack.c.l.b16 %v2462
    %v2546 = vunpack.c.l.b16 %v2463
    %v2547 = vunpack.c.l.b16 %v2464
    %v2548 = vunpack.c.l.b16 %v2465
    %v2549 = vpack.c.b16 %v2534, %v2533
    %v2550 = vpack.c.b16 %v2536, %v2535
    %v2551 = vpack.c.b16 %v2538, %v2537
    %v2552 = vpack.c.b16 %v2540, %v2539
    %v2553 = vpack.c.b16 %v2542, %v2541
    %v2554 = vpack.c.b16 %v2544, %v2543
    %v2555 = vpack.c.b16 %v2546, %v2545
    %v2556 = vpack.c.b16 %v2548, %v2547
    %2565 = vmatprep.subr.bf16.mxu0 0
    %2566 = vmatpush1.bf16.msra.mxu0 %v2549
    %2567 = vmatprep.subr.bf16.mxu0 0
    %2568 = vmatpush1.bf16.msra.mxu0 %v2550
    %2569 = vmatprep.subr.bf16.mxu0 0
    %2570 = vmatpush1.bf16.msra.mxu0 %v2551
    %2571 = vmatprep.subr.bf16.mxu0 0
    %2572 = vmatpush1.bf16.msra.mxu0 %v2552
    %2573 = vmatprep.subr.bf16.mxu0 0
    %2574 = vmatpush1.bf16.msra.mxu0 %v2553
    %2575 = vmatprep.subr.bf16.mxu0 0
    %2576 = vmatpush1.bf16.msra.mxu0 %v2554
    %2577 = vmatprep.subr.bf16.mxu0 0
    %2578 = vmatpush1.bf16.msra.mxu0 %v2555
    %2579 = vmatprep.subr.bf16.mxu0 0
    %2580 = vmatpush1.bf16.msra.mxu0 %v2556
    %2581 = vmatprep.subr.bf16.mxu0 0
    %2582 = vmatpush1.bf16.msra.mxu0 0
    %2583 = vmatprep.subr.bf16.mxu0 0
    %2584 = vmatpush1.bf16.msra.mxu0 0
    %2585 = vmatprep.subr.bf16.mxu0 0
    %2586 = vmatpush1.bf16.msra.mxu0 0
    %2587 = vmatprep.subr.bf16.mxu0 0
    %2588 = vmatpush1.bf16.msra.mxu0 0
    %2589 = vmatprep.subr.bf16.mxu0 0
    %2590 = vmatpush1.bf16.msra.mxu0 0
    %2591 = vmatprep.subr.bf16.mxu0 0
    %2592 = vmatpush1.bf16.msra.mxu0 0
    %2593 = vmatprep.subr.bf16.mxu0 0
    %2594 = vmatpush1.bf16.msra.mxu0 0
    %2595 = vmatprep.subr.bf16.mxu0 0
    %2596 = vmatpush1.bf16.msra.mxu0 0
    %2597 = vmatprep.mubr.bf16.mxu0 0
    %2598 = vmatmul.mubr.bf16.gmra.mrb[0].mxu0 %v2466
    %v2599 = vpop.f32.mrb[0].mxu0
    %v2600 = vadd.f32 %v2512, %v2599
    %v2601 = vpop.f32.mrb[0].mxu0
    %v2602 = vpop.f32.mrb[0].mxu0
    %v2603 = vpop.f32.mrb[0].mxu0
    %2604 = vdwg.mxu0
    %v2605 = vld [vmem:[#allocation4 + $0x18c] sm:$0x1]
    %v2606 = vunpack.c.l.bf16 %v2605
    %v2607 = vlaneseq
    %v2608 = vshrl.u32 %v2607, 7
    %v2609 = vsub.s32 0, %v2608
    %v2610 = vrot.slane %v2606, %v2609
    %v2611 = vadd.f32 %v2600, %v2610
    %v2612 = vmax.f32 %v2611, 0.0
    %v2613 = vld [vmem:[#allocation4 + $0x190] sm:$0xf]
    %v2614 = vld [vmem:[#allocation4 + $0x194] sm:$0xf]
    %v2615 = vld [vmem:[#allocation4 + $0x198] sm:$0xf]
    %v2616 = vld [vmem:[#allocation4 + $0x19c] sm:$0xf]
    %v2617 = vld [vmem:[#allocation4 + $0x1a0] sm:$0xf]
    %v2618 = vld [vmem:[#allocation4 + $0x1a4] sm:$0xf]
    %v2619 = vld [vmem:[#allocation4 + $0x1a8] sm:$0xf]
    %v2620 = vld [vmem:[#allocation4 + $0x1ac] sm:$0xf]
    %v2621 = vld [vmem:[#allocation4 + $0x1b0] sm:$0xf]
    %v2622 = vld [vmem:[#allocation4 + $0x1b4] sm:$0xf]
    %v2623 = vld [vmem:[#allocation4 + $0x1b8] sm:$0xf]
    %v2624 = vld [vmem:[#allocation4 + $0x1bc] sm:$0xf]
    %v2625 = vld [vmem:[#allocation4 + $0x1c0] sm:$0xf]
    %v2626 = vld [vmem:[#allocation4 + $0x1c4] sm:$0xf]
    %v2627 = vld [vmem:[#allocation4 + $0x1c8] sm:$0xf]
    %v2628 = vld [vmem:[#allocation4 + $0x1cc] sm:$0xf]
    %v2629 = vpack.c.bf16 %v2612, %v2612
    %v2630 = vld [vmem:[#allocation4 + $0x1d0] sm:$0x1]
    %v2631 = vunpack.c.l.bf16 %v2630
    %v2632 = vlaneseq
    %v2633 = vshrl.u32 %v2632, 7
    %v2634 = vsub.s32 0, %v2633
    %v2635 = vrot.slane %v2631, %v2634
    %v2652 = vunpack.c.l.b16 %v2613
    %v2653 = vunpack.c.l.b16 %v2614
    %v2654 = vunpack.c.l.b16 %v2615
    %v2655 = vunpack.c.l.b16 %v2616
    %v2656 = vunpack.c.l.b16 %v2617
    %v2657 = vunpack.c.l.b16 %v2618
    %v2658 = vunpack.c.l.b16 %v2619
    %v2659 = vunpack.c.l.b16 %v2620
    %v2660 = vunpack.c.l.b16 %v2621
    %v2661 = vunpack.c.l.b16 %v2622
    %v2662 = vunpack.c.l.b16 %v2623
    %v2663 = vunpack.c.l.b16 %v2624
    %v2664 = vunpack.c.l.b16 %v2625
    %v2665 = vunpack.c.l.b16 %v2626
    %v2666 = vunpack.c.l.b16 %v2627
    %v2667 = vunpack.c.l.b16 %v2628
    %v2668 = vpack.c.b16 %v2653, %v2652
    %v2669 = vpack.c.b16 %v2655, %v2654
    %v2670 = vpack.c.b16 %v2657, %v2656
    %v2671 = vpack.c.b16 %v2659, %v2658
    %v2672 = vpack.c.b16 %v2661, %v2660
    %v2673 = vpack.c.b16 %v2663, %v2662
    %v2674 = vpack.c.b16 %v2665, %v2664
    %v2675 = vpack.c.b16 %v2667, %v2666
    %2684 = vmatprep.subr.bf16.mxu0 0
    %2685 = vmatpush1.bf16.msra.mxu0 %v2668
    %2686 = vmatprep.subr.bf16.mxu0 0
    %2687 = vmatpush1.bf16.msra.mxu0 %v2669
    %2688 = vmatprep.subr.bf16.mxu0 0
    %2689 = vmatpush1.bf16.msra.mxu0 %v2670
    %2690 = vmatprep.subr.bf16.mxu0 0
    %2691 = vmatpush1.bf16.msra.mxu0 %v2671
    %2692 = vmatprep.subr.bf16.mxu0 0
    %2693 = vmatpush1.bf16.msra.mxu0 %v2672
    %2694 = vmatprep.subr.bf16.mxu0 0
    %2695 = vmatpush1.bf16.msra.mxu0 %v2673
    %2696 = vmatprep.subr.bf16.mxu0 0
    %2697 = vmatpush1.bf16.msra.mxu0 %v2674
    %2698 = vmatprep.subr.bf16.mxu0 0
    %2699 = vmatpush1.bf16.msra.mxu0 %v2675
    %2700 = vmatprep.subr.bf16.mxu0 0
    %2701 = vmatpush1.bf16.msra.mxu0 0
    %2702 = vmatprep.subr.bf16.mxu0 0
    %2703 = vmatpush1.bf16.msra.mxu0 0
    %2704 = vmatprep.subr.bf16.mxu0 0
    %2705 = vmatpush1.bf16.msra.mxu0 0
    %2706 = vmatprep.subr.bf16.mxu0 0
    %2707 = vmatpush1.bf16.msra.mxu0 0
    %2708 = vmatprep.subr.bf16.mxu0 0
    %2709 = vmatpush1.bf16.msra.mxu0 0
    %2710 = vmatprep.subr.bf16.mxu0 0
    %2711 = vmatpush1.bf16.msra.mxu0 0
    %2712 = vmatprep.subr.bf16.mxu0 0
    %2713 = vmatpush1.bf16.msra.mxu0 0
    %2714 = vmatprep.subr.bf16.mxu0 0
    %2715 = vmatpush1.bf16.msra.mxu0 0
    %2716 = vmatprep.mubr.bf16.mxu0 0
    %2717 = vmatmul.mubr.bf16.gmra.mrb[0].mxu0 %v2629
    %v2718 = vpop.f32.mrb[0].mxu0
    %v2719 = vadd.f32 %v2635, %v2718
    %v2720 = vpop.f32.mrb[0].mxu0
    %v2721 = vpop.f32.mrb[0].mxu0
    %v2722 = vpop.f32.mrb[0].mxu0
    %2723 = vdwg.mxu0
    %v2724 = vmax.f32 %v2719, 0.0
    %v2725 = vld [vmem:[#allocation4 + $0x1d4] sm:$0xf]
    %v2726 = vld [vmem:[#allocation4 + $0x1d8] sm:$0xf]
    %v2727 = vld [vmem:[#allocation4 + $0x1dc] sm:$0xf]
    %v2728 = vld [vmem:[#allocation4 + $0x1e0] sm:$0xf]
    %v2729 = vld [vmem:[#allocation4 + $0x1e4] sm:$0xf]
    %v2730 = vld [vmem:[#allocation4 + $0x1e8] sm:$0xf]
    %v2731 = vld [vmem:[#allocation4 + $0x1ec] sm:$0xf]
    %v2732 = vld [vmem:[#allocation4 + $0x1f0] sm:$0xf]
    %v2733 = vld [vmem:[#allocation4 + $0x1f4] sm:$0xf]
    %v2734 = vld [vmem:[#allocation4 + $0x1f8] sm:$0xf]
    %v2735 = vld [vmem:[#allocation4 + $0x1fc] sm:$0xf]
    %v2736 = vld [vmem:[#allocation4 + $0x200] sm:$0xf]
    %v2737 = vld [vmem:[#allocation4 + $0x204] sm:$0xf]
    %v2738 = vld [vmem:[#allocation4 + $0x208] sm:$0xf]
    %v2739 = vld [vmem:[#allocation4 + $0x20c] sm:$0xf]
    %v2740 = vld [vmem:[#allocation4 + $0x210] sm:$0xf]
    %v2741 = vpack.c.bf16 %v2724, %v2724
    %v2742 = vld [vmem:[#allocation4 + $0x214] sm:$0x1]
    %v2743 = vunpack.c.l.bf16 %v2742
    %v2744 = vlaneseq
    %v2745 = vshrl.u32 %v2744, 7
    %v2746 = vsub.s32 0, %v2745
    %v2747 = vrot.slane %v2743, %v2746
    %v2764 = vunpack.c.l.b16 %v2725
    %v2765 = vunpack.c.l.b16 %v2726
    %v2766 = vunpack.c.l.b16 %v2727
    %v2767 = vunpack.c.l.b16 %v2728
    %v2768 = vunpack.c.l.b16 %v2729
    %v2769 = vunpack.c.l.b16 %v2730
    %v2770 = vunpack.c.l.b16 %v2731
    %v2771 = vunpack.c.l.b16 %v2732
    %v2772 = vunpack.c.l.b16 %v2733
    %v2773 = vunpack.c.l.b16 %v2734
    %v2774 = vunpack.c.l.b16 %v2735
    %v2775 = vunpack.c.l.b16 %v2736
    %v2776 = vunpack.c.l.b16 %v2737
    %v2777 = vunpack.c.l.b16 %v2738
    %v2778 = vunpack.c.l.b16 %v2739
    %v2779 = vunpack.c.l.b16 %v2740
    %v2780 = vpack.c.b16 %v2765, %v2764
    %v2781 = vpack.c.b16 %v2767, %v2766
    %v2782 = vpack.c.b16 %v2769, %v2768
    %v2783 = vpack.c.b16 %v2771, %v2770
    %v2784 = vpack.c.b16 %v2773, %v2772
    %v2785 = vpack.c.b16 %v2775, %v2774
    %v2786 = vpack.c.b16 %v2777, %v2776
    %v2787 = vpack.c.b16 %v2779, %v2778
    %2796 = vmatprep.subr.bf16.mxu0 0
    %2797 = vmatpush1.bf16.msra.mxu0 %v2780
    %2798 = vmatprep.subr.bf16.mxu0 0
    %2799 = vmatpush1.bf16.msra.mxu0 %v2781
    %2800 = vmatprep.subr.bf16.mxu0 0
    %2801 = vmatpush1.bf16.msra.mxu0 %v2782
    %2802 = vmatprep.subr.bf16.mxu0 0
    %2803 = vmatpush1.bf16.msra.mxu0 %v2783
    %2804 = vmatprep.subr.bf16.mxu0 0
    %2805 = vmatpush1.bf16.msra.mxu0 %v2784
    %2806 = vmatprep.subr.bf16.mxu0 0
    %2807 = vmatpush1.bf16.msra.mxu0 %v2785
    %2808 = vmatprep.subr.bf16.mxu0 0
    %2809 = vmatpush1.bf16.msra.mxu0 %v2786
    %2810 = vmatprep.subr.bf16.mxu0 0
    %2811 = vmatpush1.bf16.msra.mxu0 %v2787
    %2812 = vmatprep.subr.bf16.mxu0 0
    %2813 = vmatpush1.bf16.msra.mxu0 0
    %2814 = vmatprep.subr.bf16.mxu0 0
    %2815 = vmatpush1.bf16.msra.mxu0 0
    %2816 = vmatprep.subr.bf16.mxu0 0
    %2817 = vmatpush1.bf16.msra.mxu0 0
    %2818 = vmatprep.subr.bf16.mxu0 0
    %2819 = vmatpush1.bf16.msra.mxu0 0
    %2820 = vmatprep.subr.bf16.mxu0 0
    %2821 = vmatpush1.bf16.msra.mxu0 0
    %2822 = vmatprep.subr.bf16.mxu0 0
    %2823 = vmatpush1.bf16.msra.mxu0 0
    %2824 = vmatprep.subr.bf16.mxu0 0
    %2825 = vmatpush1.bf16.msra.mxu0 0
    %2826 = vmatprep.subr.bf16.mxu0 0
    %2827 = vmatpush1.bf16.msra.mxu0 0
    %2828 = vmatprep.mubr.bf16.mxu0 0
    %2829 = vmatmul.mubr.bf16.gmra.mrb[0].mxu0 %v2741
    %v2830 = vpop.f32.mrb[0].mxu0
    %v2831 = vadd.f32 %v2747, %v2830
    %v2832 = vpop.f32.mrb[0].mxu0
    %v2833 = vpop.f32.mrb[0].mxu0
    %v2834 = vpop.f32.mrb[0].mxu0
    %2835 = vdwg.mxu0
    %v2836 = vmax.f32 %v2831, 0.0
    %v2837 = vld [vmem:[#allocation4 + $0x218] sm:$0xf]
    %v2838 = vld [vmem:[#allocation4 + $0x21c] sm:$0xf]
    %v2839 = vld [vmem:[#allocation4 + $0x220] sm:$0xf]
    %v2840 = vld [vmem:[#allocation4 + $0x224] sm:$0xf]
    %v2841 = vld [vmem:[#allocation4 + $0x228] sm:$0xf]
    %v2842 = vld [vmem:[#allocation4 + $0x22c] sm:$0xf]
    %v2843 = vld [vmem:[#allocation4 + $0x230] sm:$0xf]
    %v2844 = vld [vmem:[#allocation4 + $0x234] sm:$0xf]
    %v2845 = vld [vmem:[#allocation4 + $0x238] sm:$0xf]
    %v2846 = vld [vmem:[#allocation4 + $0x23c] sm:$0xf]
    %v2847 = vld [vmem:[#allocation4 + $0x240] sm:$0xf]
    %v2848 = vld [vmem:[#allocation4 + $0x244] sm:$0xf]
    %v2849 = vld [vmem:[#allocation4 + $0x248] sm:$0xf]
    %v2850 = vld [vmem:[#allocation4 + $0x24c] sm:$0xf]
    %v2851 = vld [vmem:[#allocation4 + $0x250] sm:$0xf]
    %v2852 = vld [vmem:[#allocation4 + $0x254] sm:$0xf]
    %v2853 = vpack.c.bf16 %v2836, %v2836
    %v2854 = vld [vmem:[#allocation4 + $0x258] sm:$0x1]
    %v2855 = vunpack.c.l.bf16 %v2854
    %v2856 = vlaneseq
    %v2857 = vshrl.u32 %v2856, 7
    %v2858 = vsub.s32 0, %v2857
    %v2859 = vrot.slane %v2855, %v2858
    %v2876 = vunpack.c.l.b16 %v2837
    %v2877 = vunpack.c.l.b16 %v2838
    %v2878 = vunpack.c.l.b16 %v2839
    %v2879 = vunpack.c.l.b16 %v2840
    %v2880 = vunpack.c.l.b16 %v2841
    %v2881 = vunpack.c.l.b16 %v2842
    %v2882 = vunpack.c.l.b16 %v2843
    %v2883 = vunpack.c.l.b16 %v2844
    %v2884 = vunpack.c.l.b16 %v2845
    %v2885 = vunpack.c.l.b16 %v2846
    %v2886 = vunpack.c.l.b16 %v2847
    %v2887 = vunpack.c.l.b16 %v2848
    %v2888 = vunpack.c.l.b16 %v2849
    %v2889 = vunpack.c.l.b16 %v2850
    %v2890 = vunpack.c.l.b16 %v2851
    %v2891 = vunpack.c.l.b16 %v2852
    %v2892 = vpack.c.b16 %v2877, %v2876
    %v2893 = vpack.c.b16 %v2879, %v2878
    %v2894 = vpack.c.b16 %v2881, %v2880
    %v2895 = vpack.c.b16 %v2883, %v2882
    %v2896 = vpack.c.b16 %v2885, %v2884
    %v2897 = vpack.c.b16 %v2887, %v2886
    %v2898 = vpack.c.b16 %v2889, %v2888
    %v2899 = vpack.c.b16 %v2891, %v2890
    %2908 = vmatprep.subr.bf16.mxu0 0
    %2909 = vmatpush1.bf16.msra.mxu0 %v2892
    %2910 = vmatprep.subr.bf16.mxu0 0
    %2911 = vmatpush1.bf16.msra.mxu0 %v2893
    %2912 = vmatprep.subr.bf16.mxu0 0
    %2913 = vmatpush1.bf16.msra.mxu0 %v2894
    %2914 = vmatprep.subr.bf16.mxu0 0
    %2915 = vmatpush1.bf16.msra.mxu0 %v2895
    %2916 = vmatprep.subr.bf16.mxu0 0
    %2917 = vmatpush1.bf16.msra.mxu0 %v2896
    %2918 = vmatprep.subr.bf16.mxu0 0
    %2919 = vmatpush1.bf16.msra.mxu0 %v2897
    %2920 = vmatprep.subr.bf16.mxu0 0
    %2921 = vmatpush1.bf16.msra.mxu0 %v2898
    %2922 = vmatprep.subr.bf16.mxu0 0
    %2923 = vmatpush1.bf16.msra.mxu0 %v2899
    %2924 = vmatprep.subr.bf16.mxu0 0
    %2925 = vmatpush1.bf16.msra.mxu0 0
    %2926 = vmatprep.subr.bf16.mxu0 0
    %2927 = vmatpush1.bf16.msra.mxu0 0
    %2928 = vmatprep.subr.bf16.mxu0 0
    %2929 = vmatpush1.bf16.msra.mxu0 0
    %2930 = vmatprep.subr.bf16.mxu0 0
    %2931 = vmatpush1.bf16.msra.mxu0 0
    %2932 = vmatprep.subr.bf16.mxu0 0
    %2933 = vmatpush1.bf16.msra.mxu0 0
    %2934 = vmatprep.subr.bf16.mxu0 0
    %2935 = vmatpush1.bf16.msra.mxu0 0
    %2936 = vmatprep.subr.bf16.mxu0 0
    %2937 = vmatpush1.bf16.msra.mxu0 0
    %2938 = vmatprep.subr.bf16.mxu0 0
    %2939 = vmatpush1.bf16.msra.mxu0 0
    %2940 = vmatprep.mubr.bf16.mxu0 0
    %2941 = vmatmul.mubr.bf16.gmra.mrb[0].mxu0 %v2853
    %v2942 = vpop.f32.mrb[0].mxu0
    %v2943 = vadd.f32 %v2859, %v2942
    %v2944 = vpop.f32.mrb[0].mxu0
    %v2945 = vpop.f32.mrb[0].mxu0
    %v2946 = vpop.f32.mrb[0].mxu0
    %2947 = vdwg.mxu0
    %2948 = vst [vmem:[%s4] sm:$0x3] %v2943
    // Predicated region
    $region26: #{forward.1} parent=1 // pred_check
      _
    $region27: #{forward.1} parent=1 // pred_check_branch
      %2950 = sbr.rel (0) target = $region29
    $region28: #{forward.1} parent=1 // pred_region
      _
    $region29: #{forward.1} parent=1 // pred_fallthru
      _
    // Predicated region
    $region30: #{forward.1} parent=1 // pred_check
      _
    $region31: #{forward.1} parent=1 // pred_check_branch
      %2952 = sbr.rel (0) target = $region33
    $region32: #{forward.1} parent=1 // pred_region
      _
    $region33: #{forward.1} parent=1 // pred_fallthru
      _
    %2953 = vsyncpa [#allocation3], 1
    %2954 = vsyncpa [#allocation5], 1

</llo_original>
